<compile_context>
chip_gen: v6e
topology: v6e:2x2x1
jax: 0.10.0
libtpu: 0.0.40
codegen_flags: <defaults>
</compile_context>

<pallas_src>
import functools

import numpy as np

import jax
import jax.numpy as jnp
from jax import lax
from jax.experimental import pallas as pl
from jax.experimental.pallas import tpu as pltpu

N_BINS = 15
LANES = 128
CHUNK_ROWS = 64        # rows per inner fori_loop step (8 vregs/stream -> low vreg pressure)
MAX_TILE_ROWS = 4096   # 2 f32 streams: 4 MiB/step, ~8.4 MiB double-buffered incl. output block
NUM_CORE_SPLITS = 2    # leading "parallel" grid axis (2 TensorCores on v7x; free on v5e/v6e)


def _round_up(x, m):
    return ((x + m - 1) // m) * m


def _ece_hist_kernel(conf_ref, corr_ref, out_ref, *,
                     boundaries, chunk_rows, n_chunks, n_thresh):
    """Accumulates cumulative-threshold sums into the resident output block.

    out_ref rows: [0..n_thresh)          -> sum over {conf > b_k} of 1
                  [n_thresh..2*n_thresh) -> sum over {conf > b_k} of correct
                  [2*n_thresh..3*n_thresh)-> sum over {conf > b_k} of conf
    Each row is an (8,128) per-(sublane,lane) partial; the cross-lane reduce
    and per-bin differences happen once in the (tiny) wrapper epilogue.
    """
    @pl.when(pl.program_id(1) == 0)
    def _init():
        out_ref[...] = jnp.zeros_like(out_ref)

    sub = chunk_rows // 8  # vregs per chunk per stream

    def chunk_body(c, carry):
        r0 = pl.multiple_of(c * chunk_rows, chunk_rows)
        conf = conf_ref[pl.ds(r0, chunk_rows), :].reshape(sub, 8, LANES)
        corr = corr_ref[pl.ds(r0, chunk_rows), :].reshape(sub, 8, LANES)
        # Cumulative thresholds: one compare + three masked reduces per
        # boundary; partials stay vreg-shaped (8,128) and are accumulated
        # directly into the output block (no concatenate, no big temporaries).
        for k in range(n_thresh):
            gt = conf > boundaries[k]
            out_ref[k] += jnp.sum(gt.astype(jnp.float32), axis=0)
            out_ref[n_thresh + k] += jnp.sum(jnp.where(gt, corr, 0.0), axis=0)
            out_ref[2 * n_thresh + k] += jnp.sum(jnp.where(gt, conf, 0.0), axis=0)
        return carry

    lax.fori_loop(0, n_chunks, chunk_body, 0)


def ece_loss_pallas(confidences, predictions, labels, n_bins=N_BINS):
    """Replicates _ECELoss.forward(confidences, predictions, labels).

    Returns a length-1 float32 array (matches the torch.zeros(1) accumulator).
    """
    n = confidences.shape[0]
    n_thresh = n_bins + 1

    rows_needed = max(1, -(-n // LANES))
    tile_rows = min(MAX_TILE_ROWS, _round_up(rows_needed, CHUNK_ROWS))
    rows_padded = _round_up(rows_needed, NUM_CORE_SPLITS * tile_rows)
    pad = rows_padded * LANES - n
    tiles_per_core = (rows_padded // tile_rows) // NUM_CORE_SPLITS
    n_chunks = tile_rows // CHUNK_ROWS
    chunk_rows = CHUNK_ROWS

    # Precompute `correct` in the wrapper (fused by XLA with the pad/reshape);
    # removes the int16 class-id hazard and one whole DMA stream.
    conf = jnp.pad(confidences.astype(jnp.float32), (0, pad)).reshape(rows_padded, LANES)
    correct = jnp.pad((predictions == labels).astype(jnp.float32),
                      (0, pad)).reshape(rows_padded, LANES)

    # Static f32 boundaries (same values as torch.linspace(0,1,n_bins+1) mod last-ulp).
    boundaries = tuple(
        float(b) for b in np.linspace(0.0, 1.0, n_thresh).astype(np.float32))

    kernel = functools.partial(
        _ece_hist_kernel, boundaries=boundaries, chunk_rows=chunk_rows,
        n_chunks=n_chunks, n_thresh=n_thresh)

    slabs = pl.pallas_call(
        kernel,
        out_shape=jax.ShapeDtypeStruct(
            (NUM_CORE_SPLITS, 3 * n_thresh, 8, LANES), jnp.float32),
        grid_spec=pltpu.PrefetchScalarGridSpec(
            num_scalar_prefetch=0,
            grid=(NUM_CORE_SPLITS, tiles_per_core),
            in_specs=[
                pl.BlockSpec((tile_rows, LANES),
                             lambda c, i: (c * tiles_per_core + i, 0)),
                pl.BlockSpec((tile_rows, LANES),
                             lambda c, i: (c * tiles_per_core + i, 0)),
            ],
            # Output block depends only on the parallel core axis -> resident
            # accumulator across the "arbitrary" tile axis, one slab per core.
            out_specs=pl.BlockSpec((None, 3 * n_thresh, 8, LANES),
                                   lambda c, i: (c, 0, 0, 0)),
        ),
        compiler_params=pltpu.CompilerParams(
            dimension_semantics=("parallel", "arbitrary")),
    )(conf, correct)

    # Tiny combine / per-bin epilogue (trivial second pass; a few hundred flops).
    cum = slabs.reshape(NUM_CORE_SPLITS, 3, n_thresh, 8 * LANES).sum(axis=(0, 3))
    cnt_c, sacc_c, sconf_c = cum[0], cum[1], cum[2]
    cnt = cnt_c[:n_bins] - cnt_c[1:]        # bin b = {conf > b_b} \ {conf > b_{b+1}}
    sacc = sacc_c[:n_bins] - sacc_c[1:]
    sconf = sconf_c[:n_bins] - sconf_c[1:]
    prop = cnt / float(n)
    cnt_safe = jnp.maximum(cnt, 1.0)
    contrib = jnp.where(cnt > 0.0,
                        jnp.abs(sconf / cnt_safe - sacc / cnt_safe) * prop, 0.0)
    return jnp.sum(contrib).reshape(1)


def _ece_reference(confidences, predictions, labels, n_bins=N_BINS):
    """Pure-JAX reference mirroring the PyTorch loop (same f32 boundaries)."""
    acc = (predictions == labels).astype(jnp.float32)
    conf = confidences.astype(jnp.float32)
    boundaries = np.linspace(0.0, 1.0, n_bins + 1).astype(np.float32)
    ece = jnp.zeros((1,), jnp.float32)
    for b in range(n_bins):
        lo, up = float(boundaries[b]), float(boundaries[b + 1])
        in_bin = (conf > lo) & (conf <= up)
        in_f = in_bin.astype(jnp.float32)
        cnt = jnp.sum(in_f)
        prop = cnt / conf.shape[0]
        cnt_safe = jnp.maximum(cnt, 1.0)
        acc_in = jnp.sum(in_f * acc) / cnt_safe
        conf_in = jnp.sum(in_f * conf) / cnt_safe
        ece = ece + jnp.where(cnt > 0, jnp.abs(conf_in - acc_in) * prop, 0.0)
    return ece


if __name__ == "__main__":
    key = jax.random.PRNGKey(0)
    k1, k2, k3 = jax.random.split(key, 3)

    n = 1000          # non-multiple of the tile to exercise padding
    n_classes = 10

    confidences = jax.random.uniform(k1, (n,), dtype=jnp.float32)
    predictions = jax.random.randint(k2, (n,), 0, n_classes, dtype=jnp.int32)
    labels = jax.random.randint(k3, (n,), 0, n_classes, dtype=jnp.int32)

    ece = ece_loss_pallas(confidences, predictions, labels)
    ece = jax.block_until_ready(ece)

    ece_ref = _ece_reference(confidences, predictions, labels)
    assert ece.shape == (1,)
    assert jnp.allclose(ece, ece_ref, atol=1e-5, rtol=1e-5), (ece, ece_ref)

    print("KERNEL_OK")
</pallas_src>

<mosaic_0001>
module attributes {stable_mosaic.version = 11 : i64} {
  func.func @_ece_hist_kernel(%arg0: i32, %arg1: i32, %arg2: memref<64x128xf32, #tpu.memory_space<vmem>>, %arg3: memref<64x128xf32, #tpu.memory_space<vmem>>, %arg4: memref<1x48x8x128xf32, #tpu.memory_space<vmem>>) attributes {dimension_semantics = [#tpu.dimension_semantics<parallel>, #tpu.dimension_semantics<arbitrary>], iteration_bounds = array<i64: 2, 1>, scalar_prefetch = 0 : i64, scratch_operands = 0 : i64, tpu.core_type = #tpu.core_type<tc>, window_params = [{transform_indices = @transform_0, window_bounds = array<i64: 64, 128>}, {transform_indices = @transform_1, window_bounds = array<i64: 64, 128>}, {transform_indices = @transform_2, window_bounds = array<i64: 1, 48, 8, 128>}]} {
    %c0_i32 = arith.constant 0 : i32
    %0 = arith.cmpi eq, %arg1, %c0_i32 : i32
    %1 = arith.extui %0 : i1 to i32
    %c0_i32_0 = arith.constant 0 : i32
    %2 = arith.cmpi ne, %1, %c0_i32_0 : i32
    scf.if %2 {
      %cst_435 = arith.constant 0.000000e+00 : f32
      %475 = vector.broadcast %cst_435 : f32 to vector<48x8x128xf32>
      %c0_436 = arith.constant 0 : index
      %c0_437 = arith.constant 0 : index
      %c0_438 = arith.constant 0 : index
      %c0_439 = arith.constant 0 : index
      %476 = vector.load %arg4[%c0_436, %c0_437, %c0_438, %c0_439] : memref<1x48x8x128xf32, #tpu.memory_space<vmem>>, vector<1x48x8x128xf32>
      %477 = vector.shape_cast %476 : vector<1x48x8x128xf32> to vector<48x8x128xf32>
      %478 = vector.shape_cast %475 : vector<48x8x128xf32> to vector<1x48x8x128xf32>
      tpu.vector_store %arg4[%c0_436, %c0_437, %c0_438, %c0_439], %478 {strides = array<i32>} : memref<1x48x8x128xf32, #tpu.memory_space<vmem>>, vector<1x48x8x128xf32>,
    } else {
    }
    %c0_i32_1 = arith.constant 0 : i32
    %c64_i32 = arith.constant 64 : i32
    %3 = arith.muli %c0_i32_1, %c64_i32 : i32
    %4 = tpu.assume_multiple %3, 64 : i32
    %5 = arith.index_cast %4 : i32 to index
    %c0 = arith.constant 0 : index
    %6 = vector.load %arg2[%5, %c0] : memref<64x128xf32, #tpu.memory_space<vmem>>, vector<64x128xf32>
    %7 = vector.shape_cast %6 : vector<64x128xf32> to vector<8x8x128xf32>
    %8 = arith.index_cast %4 : i32 to index
    %c0_2 = arith.constant 0 : index
    %9 = vector.load %arg3[%8, %c0_2] : memref<64x128xf32, #tpu.memory_space<vmem>>, vector<64x128xf32>
    %10 = vector.shape_cast %9 : vector<64x128xf32> to vector<8x8x128xf32>
    %cst = arith.constant 0.000000e+00 : f32
    %11 = vector.broadcast %cst : f32 to vector<8x8x128xf32>
    %12 = arith.cmpf ogt, %7, %11 : vector<8x8x128xf32>
    %c0_3 = arith.constant 0 : index
    %c0_4 = arith.constant 0 : index
    %c0_5 = arith.constant 0 : index
    %c0_6 = arith.constant 0 : index
    %13 = vector.load %arg4[%c0_3, %c0_4, %c0_5, %c0_6] : memref<1x48x8x128xf32, #tpu.memory_space<vmem>>, vector<1x1x8x128xf32>
    %14 = vector.shape_cast %13 : vector<1x1x8x128xf32> to vector<8x128xf32>
    %15 = arith.extui %12 : vector<8x8x128xi1> to vector<8x8x128xi32>
    %16 = arith.sitofp %15 : vector<8x8x128xi32> to vector<8x8x128xf32>
    %cst_7 = arith.constant dense<0.000000e+00> : vector<8x128xf32>
    %17 = vector.multi_reduction <add>, %16, %cst_7 [0] : vector<8x8x128xf32> to vector<8x128xf32>
    %18 = arith.addf %14, %17 : vector<8x128xf32>
    %c0_8 = arith.constant 0 : index
    %c0_9 = arith.constant 0 : index
    %c0_10 = arith.constant 0 : index
    %c0_11 = arith.constant 0 : index
    %19 = vector.load %arg4[%c0_8, %c0_9, %c0_10, %c0_11] : memref<1x48x8x128xf32, #tpu.memory_space<vmem>>, vector<1x1x8x128xf32>
    %20 = vector.shape_cast %19 : vector<1x1x8x128xf32> to vector<8x128xf32>
    %21 = vector.shape_cast %18 : vector<8x128xf32> to vector<1x1x8x128xf32>
    tpu.vector_store %arg4[%c0_8, %c0_9, %c0_10, %c0_11], %21 {strides = array<i32>} : memref<1x48x8x128xf32, #tpu.memory_space<vmem>>, vector<1x1x8x128xf32>,
    %c0_12 = arith.constant 0 : index
    %c16 = arith.constant 16 : index
    %c0_13 = arith.constant 0 : index
    %c0_14 = arith.constant 0 : index
    %22 = vector.load %arg4[%c0_12, %c16, %c0_13, %c0_14] : memref<1x48x8x128xf32, #tpu.memory_space<vmem>>, vector<1x1x8x128xf32>
    %23 = vector.shape_cast %22 : vector<1x1x8x128xf32> to vector<8x128xf32>
    %cst_15 = arith.constant 0.000000e+00 : f32
    %24 = vector.broadcast %cst_15 : f32 to vector<8x8x128xf32>
    %25 = arith.select %12, %10, %24 : vector<8x8x128xi1>, vector<8x8x128xf32>
    %cst_16 = arith.constant dense<0.000000e+00> : vector<8x128xf32>
    %26 = vector.multi_reduction <add>, %25, %cst_16 [0] : vector<8x8x128xf32> to vector<8x128xf32>
    %27 = arith.addf %23, %26 : vector<8x128xf32>
    %c0_17 = arith.constant 0 : index
    %c16_18 = arith.constant 16 : index
    %c0_19 = arith.constant 0 : index
    %c0_20 = arith.constant 0 : index
    %28 = vector.load %arg4[%c0_17, %c16_18, %c0_19, %c0_20] : memref<1x48x8x128xf32, #tpu.memory_space<vmem>>, vector<1x1x8x128xf32>
    %29 = vector.shape_cast %28 : vector<1x1x8x128xf32> to vector<8x128xf32>
    %30 = vector.shape_cast %27 : vector<8x128xf32> to vector<1x1x8x128xf32>
    tpu.vector_store %arg4[%c0_17, %c16_18, %c0_19, %c0_20], %30 {strides = array<i32>} : memref<1x48x8x128xf32, #tpu.memory_space<vmem>>, vector<1x1x8x128xf32>,
    %c0_21 = arith.constant 0 : index
    %c32 = arith.constant 32 : index
    %c0_22 = arith.constant 0 : index
    %c0_23 = arith.constant 0 : index
    %31 = vector.load %arg4[%c0_21, %c32, %c0_22, %c0_23] : memref<1x48x8x128xf32, #tpu.memory_space<vmem>>, vector<1x1x8x128xf32>
    %32 = vector.shape_cast %31 : vector<1x1x8x128xf32> to vector<8x128xf32>
    %cst_24 = arith.constant 0.000000e+00 : f32
    %33 = vector.broadcast %cst_24 : f32 to vector<8x8x128xf32>
    %34 = arith.select %12, %7, %33 : vector<8x8x128xi1>, vector<8x8x128xf32>
    %cst_25 = arith.constant dense<0.000000e+00> : vector<8x128xf32>
    %35 = vector.multi_reduction <add>, %34, %cst_25 [0] : vector<8x8x128xf32> to vector<8x128xf32>
    %36 = arith.addf %32, %35 : vector<8x128xf32>
    %c0_26 = arith.constant 0 : index
    %c32_27 = arith.constant 32 : index
    %c0_28 = arith.constant 0 : index
    %c0_29 = arith.constant 0 : index
    %37 = vector.load %arg4[%c0_26, %c32_27, %c0_28, %c0_29] : memref<1x48x8x128xf32, #tpu.memory_space<vmem>>, vector<1x1x8x128xf32>
    %38 = vector.shape_cast %37 : vector<1x1x8x128xf32> to vector<8x128xf32>
    %39 = vector.shape_cast %36 : vector<8x128xf32> to vector<1x1x8x128xf32>
    tpu.vector_store %arg4[%c0_26, %c32_27, %c0_28, %c0_29], %39 {strides = array<i32>} : memref<1x48x8x128xf32, #tpu.memory_space<vmem>>, vector<1x1x8x128xf32>,
    %cst_30 = arith.constant 0.0666666701 : f32
    %40 = vector.broadcast %cst_30 : f32 to vector<8x8x128xf32>
    %41 = arith.cmpf ogt, %7, %40 : vector<8x8x128xf32>
    %c0_31 = arith.constant 0 : index
    %c1 = arith.constant 1 : index
    %c0_32 = arith.constant 0 : index
    %c0_33 = arith.constant 0 : index
    %42 = vector.load %arg4[%c0_31, %c1, %c0_32, %c0_33] : memref<1x48x8x128xf32, #tpu.memory_space<vmem>>, vector<1x1x8x128xf32>
    %43 = vector.shape_cast %42 : vector<1x1x8x128xf32> to vector<8x128xf32>
    %44 = arith.extui %41 : vector<8x8x128xi1> to vector<8x8x128xi32>
    %45 = arith.sitofp %44 : vector<8x8x128xi32> to vector<8x8x128xf32>
    %cst_34 = arith.constant dense<0.000000e+00> : vector<8x128xf32>
    %46 = vector.multi_reduction <add>, %45, %cst_34 [0] : vector<8x8x128xf32> to vector<8x128xf32>
    %47 = arith.addf %43, %46 : vector<8x128xf32>
    %c0_35 = arith.constant 0 : index
    %c1_36 = arith.constant 1 : index
    %c0_37 = arith.constant 0 : index
    %c0_38 = arith.constant 0 : index
    %48 = vector.load %arg4[%c0_35, %c1_36, %c0_37, %c0_38] : memref<1x48x8x128xf32, #tpu.memory_space<vmem>>, vector<1x1x8x128xf32>
    %49 = vector.shape_cast %48 : vector<1x1x8x128xf32> to vector<8x128xf32>
    %50 = vector.shape_cast %47 : vector<8x128xf32> to vector<1x1x8x128xf32>
    tpu.vector_store %arg4[%c0_35, %c1_36, %c0_37, %c0_38], %50 {strides = array<i32>} : memref<1x48x8x128xf32, #tpu.memory_space<vmem>>, vector<1x1x8x128xf32>,
    %c0_39 = arith.constant 0 : index
    %c17 = arith.constant 17 : index
    %c0_40 = arith.constant 0 : index
    %c0_41 = arith.constant 0 : index
    %51 = vector.load %arg4[%c0_39, %c17, %c0_40, %c0_41] : memref<1x48x8x128xf32, #tpu.memory_space<vmem>>, vector<1x1x8x128xf32>
    %52 = vector.shape_cast %51 : vector<1x1x8x128xf32> to vector<8x128xf32>
    %cst_42 = arith.constant 0.000000e+00 : f32
    %53 = vector.broadcast %cst_42 : f32 to vector<8x8x128xf32>
    %54 = arith.select %41, %10, %53 : vector<8x8x128xi1>, vector<8x8x128xf32>
    %cst_43 = arith.constant dense<0.000000e+00> : vector<8x128xf32>
    %55 = vector.multi_reduction <add>, %54, %cst_43 [0] : vector<8x8x128xf32> to vector<8x128xf32>
    %56 = arith.addf %52, %55 : vector<8x128xf32>
    %c0_44 = arith.constant 0 : index
    %c17_45 = arith.constant 17 : index
    %c0_46 = arith.constant 0 : index
    %c0_47 = arith.constant 0 : index
    %57 = vector.load %arg4[%c0_44, %c17_45, %c0_46, %c0_47] : memref<1x48x8x128xf32, #tpu.memory_space<vmem>>, vector<1x1x8x128xf32>
    %58 = vector.shape_cast %57 : vector<1x1x8x128xf32> to vector<8x128xf32>
    %59 = vector.shape_cast %56 : vector<8x128xf32> to vector<1x1x8x128xf32>
    tpu.vector_store %arg4[%c0_44, %c17_45, %c0_46, %c0_47], %59 {strides = array<i32>} : memref<1x48x8x128xf32, #tpu.memory_space<vmem>>, vector<1x1x8x128xf32>,
    %c0_48 = arith.constant 0 : index
    %c33 = arith.constant 33 : index
    %c0_49 = arith.constant 0 : index
    %c0_50 = arith.constant 0 : index
    %60 = vector.load %arg4[%c0_48, %c33, %c0_49, %c0_50] : memref<1x48x8x128xf32, #tpu.memory_space<vmem>>, vector<1x1x8x128xf32>
    %61 = vector.shape_cast %60 : vector<1x1x8x128xf32> to vector<8x128xf32>
    %cst_51 = arith.constant 0.000000e+00 : f32
    %62 = vector.broadcast %cst_51 : f32 to vector<8x8x128xf32>
    %63 = arith.select %41, %7, %62 : vector<8x8x128xi1>, vector<8x8x128xf32>
    %cst_52 = arith.constant dense<0.000000e+00> : vector<8x128xf32>
    %64 = vector.multi_reduction <add>, %63, %cst_52 [0] : vector<8x8x128xf32> to vector<8x128xf32>
    %65 = arith.addf %61, %64 : vector<8x128xf32>
    %c0_53 = arith.constant 0 : index
    %c33_54 = arith.constant 33 : index
    %c0_55 = arith.constant 0 : index
    %c0_56 = arith.constant 0 : index
    %66 = vector.load %arg4[%c0_53, %c33_54, %c0_55, %c0_56] : memref<1x48x8x128xf32, #tpu.memory_space<vmem>>, vector<1x1x8x128xf32>
    %67 = vector.shape_cast %66 : vector<1x1x8x128xf32> to vector<8x128xf32>
    %68 = vector.shape_cast %65 : vector<8x128xf32> to vector<1x1x8x128xf32>
    tpu.vector_store %arg4[%c0_53, %c33_54, %c0_55, %c0_56], %68 {strides = array<i32>} : memref<1x48x8x128xf32, #tpu.memory_space<vmem>>, vector<1x1x8x128xf32>,
    %cst_57 = arith.constant 0.13333334 : f32
    %69 = vector.broadcast %cst_57 : f32 to vector<8x8x128xf32>
    %70 = arith.cmpf ogt, %7, %69 : vector<8x8x128xf32>
    %c0_58 = arith.constant 0 : index
    %c2 = arith.constant 2 : index
    %c0_59 = arith.constant 0 : index
    %c0_60 = arith.constant 0 : index
    %71 = vector.load %arg4[%c0_58, %c2, %c0_59, %c0_60] : memref<1x48x8x128xf32, #tpu.memory_space<vmem>>, vector<1x1x8x128xf32>
    %72 = vector.shape_cast %71 : vector<1x1x8x128xf32> to vector<8x128xf32>
    %73 = arith.extui %70 : vector<8x8x128xi1> to vector<8x8x128xi32>
    %74 = arith.sitofp %73 : vector<8x8x128xi32> to vector<8x8x128xf32>
    %cst_61 = arith.constant dense<0.000000e+00> : vector<8x128xf32>
    %75 = vector.multi_reduction <add>, %74, %cst_61 [0] : vector<8x8x128xf32> to vector<8x128xf32>
    %76 = arith.addf %72, %75 : vector<8x128xf32>
    %c0_62 = arith.constant 0 : index
    %c2_63 = arith.constant 2 : index
    %c0_64 = arith.constant 0 : index
    %c0_65 = arith.constant 0 : index
    %77 = vector.load %arg4[%c0_62, %c2_63, %c0_64, %c0_65] : memref<1x48x8x128xf32, #tpu.memory_space<vmem>>, vector<1x1x8x128xf32>
    %78 = vector.shape_cast %77 : vector<1x1x8x128xf32> to vector<8x128xf32>
    %79 = vector.shape_cast %76 : vector<8x128xf32> to vector<1x1x8x128xf32>
    tpu.vector_store %arg4[%c0_62, %c2_63, %c0_64, %c0_65], %79 {strides = array<i32>} : memref<1x48x8x128xf32, #tpu.memory_space<vmem>>, vector<1x1x8x128xf32>,
    %c0_66 = arith.constant 0 : index
    %c18 = arith.constant 18 : index
    %c0_67 = arith.constant 0 : index
    %c0_68 = arith.constant 0 : index
    %80 = vector.load %arg4[%c0_66, %c18, %c0_67, %c0_68] : memref<1x48x8x128xf32, #tpu.memory_space<vmem>>, vector<1x1x8x128xf32>
    %81 = vector.shape_cast %80 : vector<1x1x8x128xf32> to vector<8x128xf32>
    %cst_69 = arith.constant 0.000000e+00 : f32
    %82 = vector.broadcast %cst_69 : f32 to vector<8x8x128xf32>
    %83 = arith.select %70, %10, %82 : vector<8x8x128xi1>, vector<8x8x128xf32>
    %cst_70 = arith.constant dense<0.000000e+00> : vector<8x128xf32>
    %84 = vector.multi_reduction <add>, %83, %cst_70 [0] : vector<8x8x128xf32> to vector<8x128xf32>
    %85 = arith.addf %81, %84 : vector<8x128xf32>
    %c0_71 = arith.constant 0 : index
    %c18_72 = arith.constant 18 : index
    %c0_73 = arith.constant 0 : index
    %c0_74 = arith.constant 0 : index
    %86 = vector.load %arg4[%c0_71, %c18_72, %c0_73, %c0_74] : memref<1x48x8x128xf32, #tpu.memory_space<vmem>>, vector<1x1x8x128xf32>
    %87 = vector.shape_cast %86 : vector<1x1x8x128xf32> to vector<8x128xf32>
    %88 = vector.shape_cast %85 : vector<8x128xf32> to vector<1x1x8x128xf32>
    tpu.vector_store %arg4[%c0_71, %c18_72, %c0_73, %c0_74], %88 {strides = array<i32>} : memref<1x48x8x128xf32, #tpu.memory_space<vmem>>, vector<1x1x8x128xf32>,
    %c0_75 = arith.constant 0 : index
    %c34 = arith.constant 34 : index
    %c0_76 = arith.constant 0 : index
    %c0_77 = arith.constant 0 : index
    %89 = vector.load %arg4[%c0_75, %c34, %c0_76, %c0_77] : memref<1x48x8x128xf32, #tpu.memory_space<vmem>>, vector<1x1x8x128xf32>
    %90 = vector.shape_cast %89 : vector<1x1x8x128xf32> to vector<8x128xf32>
    %cst_78 = arith.constant 0.000000e+00 : f32
    %91 = vector.broadcast %cst_78 : f32 to vector<8x8x128xf32>
    %92 = arith.select %70, %7, %91 : vector<8x8x128xi1>, vector<8x8x128xf32>
    %cst_79 = arith.constant dense<0.000000e+00> : vector<8x128xf32>
    %93 = vector.multi_reduction <add>, %92, %cst_79 [0] : vector<8x8x128xf32> to vector<8x128xf32>
    %94 = arith.addf %90, %93 : vector<8x128xf32>
    %c0_80 = arith.constant 0 : index
    %c34_81 = arith.constant 34 : index
    %c0_82 = arith.constant 0 : index
    %c0_83 = arith.constant 0 : index
    %95 = vector.load %arg4[%c0_80, %c34_81, %c0_82, %c0_83] : memref<1x48x8x128xf32, #tpu.memory_space<vmem>>, vector<1x1x8x128xf32>
    %96 = vector.shape_cast %95 : vector<1x1x8x128xf32> to vector<8x128xf32>
    %97 = vector.shape_cast %94 : vector<8x128xf32> to vector<1x1x8x128xf32>
    tpu.vector_store %arg4[%c0_80, %c34_81, %c0_82, %c0_83], %97 {strides = array<i32>} : memref<1x48x8x128xf32, #tpu.memory_space<vmem>>, vector<1x1x8x128xf32>,
    %cst_84 = arith.constant 2.000000e-01 : f32
    %98 = vector.broadcast %cst_84 : f32 to vector<8x8x128xf32>
    %99 = arith.cmpf ogt, %7, %98 : vector<8x8x128xf32>
    %c0_85 = arith.constant 0 : index
    %c3 = arith.constant 3 : index
    %c0_86 = arith.constant 0 : index
    %c0_87 = arith.constant 0 : index
    %100 = vector.load %arg4[%c0_85, %c3, %c0_86, %c0_87] : memref<1x48x8x128xf32, #tpu.memory_space<vmem>>, vector<1x1x8x128xf32>
    %101 = vector.shape_cast %100 : vector<1x1x8x128xf32> to vector<8x128xf32>
    %102 = arith.extui %99 : vector<8x8x128xi1> to vector<8x8x128xi32>
    %103 = arith.sitofp %102 : vector<8x8x128xi32> to vector<8x8x128xf32>
    %cst_88 = arith.constant dense<0.000000e+00> : vector<8x128xf32>
    %104 = vector.multi_reduction <add>, %103, %cst_88 [0] : vector<8x8x128xf32> to vector<8x128xf32>
    %105 = arith.addf %101, %104 : vector<8x128xf32>
    %c0_89 = arith.constant 0 : index
    %c3_90 = arith.constant 3 : index
    %c0_91 = arith.constant 0 : index
    %c0_92 = arith.constant 0 : index
    %106 = vector.load %arg4[%c0_89, %c3_90, %c0_91, %c0_92] : memref<1x48x8x128xf32, #tpu.memory_space<vmem>>, vector<1x1x8x128xf32>
    %107 = vector.shape_cast %106 : vector<1x1x8x128xf32> to vector<8x128xf32>
    %108 = vector.shape_cast %105 : vector<8x128xf32> to vector<1x1x8x128xf32>
    tpu.vector_store %arg4[%c0_89, %c3_90, %c0_91, %c0_92], %108 {strides = array<i32>} : memref<1x48x8x128xf32, #tpu.memory_space<vmem>>, vector<1x1x8x128xf32>,
    %c0_93 = arith.constant 0 : index
    %c19 = arith.constant 19 : index
    %c0_94 = arith.constant 0 : index
    %c0_95 = arith.constant 0 : index
    %109 = vector.load %arg4[%c0_93, %c19, %c0_94, %c0_95] : memref<1x48x8x128xf32, #tpu.memory_space<vmem>>, vector<1x1x8x128xf32>
    %110 = vector.shape_cast %109 : vector<1x1x8x128xf32> to vector<8x128xf32>
    %cst_96 = arith.constant 0.000000e+00 : f32
    %111 = vector.broadcast %cst_96 : f32 to vector<8x8x128xf32>
    %112 = arith.select %99, %10, %111 : vector<8x8x128xi1>, vector<8x8x128xf32>
    %cst_97 = arith.constant dense<0.000000e+00> : vector<8x128xf32>
    %113 = vector.multi_reduction <add>, %112, %cst_97 [0] : vector<8x8x128xf32> to vector<8x128xf32>
    %114 = arith.addf %110, %113 : vector<8x128xf32>
    %c0_98 = arith.constant 0 : index
    %c19_99 = arith.constant 19 : index
    %c0_100 = arith.constant 0 : index
    %c0_101 = arith.constant 0 : index
    %115 = vector.load %arg4[%c0_98, %c19_99, %c0_100, %c0_101] : memref<1x48x8x128xf32, #tpu.memory_space<vmem>>, vector<1x1x8x128xf32>
    %116 = vector.shape_cast %115 : vector<1x1x8x128xf32> to vector<8x128xf32>
    %117 = vector.shape_cast %114 : vector<8x128xf32> to vector<1x1x8x128xf32>
    tpu.vector_store %arg4[%c0_98, %c19_99, %c0_100, %c0_101], %117 {strides = array<i32>} : memref<1x48x8x128xf32, #tpu.memory_space<vmem>>, vector<1x1x8x128xf32>,
    %c0_102 = arith.constant 0 : index
    %c35 = arith.constant 35 : index
    %c0_103 = arith.constant 0 : index
    %c0_104 = arith.constant 0 : index
    %118 = vector.load %arg4[%c0_102, %c35, %c0_103, %c0_104] : memref<1x48x8x128xf32, #tpu.memory_space<vmem>>, vector<1x1x8x128xf32>
    %119 = vector.shape_cast %118 : vector<1x1x8x128xf32> to vector<8x128xf32>
    %cst_105 = arith.constant 0.000000e+00 : f32
    %120 = vector.broadcast %cst_105 : f32 to vector<8x8x128xf32>
    %121 = arith.select %99, %7, %120 : vector<8x8x128xi1>, vector<8x8x128xf32>
    %cst_106 = arith.constant dense<0.000000e+00> : vector<8x128xf32>
    %122 = vector.multi_reduction <add>, %121, %cst_106 [0] : vector<8x8x128xf32> to vector<8x128xf32>
    %123 = arith.addf %119, %122 : vector<8x128xf32>
    %c0_107 = arith.constant 0 : index
    %c35_108 = arith.constant 35 : index
    %c0_109 = arith.constant 0 : index
    %c0_110 = arith.constant 0 : index
    %124 = vector.load %arg4[%c0_107, %c35_108, %c0_109, %c0_110] : memref<1x48x8x128xf32, #tpu.memory_space<vmem>>, vector<1x1x8x128xf32>
    %125 = vector.shape_cast %124 : vector<1x1x8x128xf32> to vector<8x128xf32>
    %126 = vector.shape_cast %123 : vector<8x128xf32> to vector<1x1x8x128xf32>
    tpu.vector_store %arg4[%c0_107, %c35_108, %c0_109, %c0_110], %126 {strides = array<i32>} : memref<1x48x8x128xf32, #tpu.memory_space<vmem>>, vector<1x1x8x128xf32>,
    %cst_111 = arith.constant 0.266666681 : f32
    %127 = vector.broadcast %cst_111 : f32 to vector<8x8x128xf32>
    %128 = arith.cmpf ogt, %7, %127 : vector<8x8x128xf32>
    %c0_112 = arith.constant 0 : index
    %c4 = arith.constant 4 : index
    %c0_113 = arith.constant 0 : index
    %c0_114 = arith.constant 0 : index
    %129 = vector.load %arg4[%c0_112, %c4, %c0_113, %c0_114] : memref<1x48x8x128xf32, #tpu.memory_space<vmem>>, vector<1x1x8x128xf32>
    %130 = vector.shape_cast %129 : vector<1x1x8x128xf32> to vector<8x128xf32>
    %131 = arith.extui %128 : vector<8x8x128xi1> to vector<8x8x128xi32>
    %132 = arith.sitofp %131 : vector<8x8x128xi32> to vector<8x8x128xf32>
    %cst_115 = arith.constant dense<0.000000e+00> : vector<8x128xf32>
    %133 = vector.multi_reduction <add>, %132, %cst_115 [0] : vector<8x8x128xf32> to vector<8x128xf32>
    %134 = arith.addf %130, %133 : vector<8x128xf32>
    %c0_116 = arith.constant 0 : index
    %c4_117 = arith.constant 4 : index
    %c0_118 = arith.constant 0 : index
    %c0_119 = arith.constant 0 : index
    %135 = vector.load %arg4[%c0_116, %c4_117, %c0_118, %c0_119] : memref<1x48x8x128xf32, #tpu.memory_space<vmem>>, vector<1x1x8x128xf32>
    %136 = vector.shape_cast %135 : vector<1x1x8x128xf32> to vector<8x128xf32>
    %137 = vector.shape_cast %134 : vector<8x128xf32> to vector<1x1x8x128xf32>
    tpu.vector_store %arg4[%c0_116, %c4_117, %c0_118, %c0_119], %137 {strides = array<i32>} : memref<1x48x8x128xf32, #tpu.memory_space<vmem>>, vector<1x1x8x128xf32>,
    %c0_120 = arith.constant 0 : index
    %c20 = arith.constant 20 : index
    %c0_121 = arith.constant 0 : index
    %c0_122 = arith.constant 0 : index
    %138 = vector.load %arg4[%c0_120, %c20, %c0_121, %c0_122] : memref<1x48x8x128xf32, #tpu.memory_space<vmem>>, vector<1x1x8x128xf32>
    %139 = vector.shape_cast %138 : vector<1x1x8x128xf32> to vector<8x128xf32>
    %cst_123 = arith.constant 0.000000e+00 : f32
    %140 = vector.broadcast %cst_123 : f32 to vector<8x8x128xf32>
    %141 = arith.select %128, %10, %140 : vector<8x8x128xi1>, vector<8x8x128xf32>
    %cst_124 = arith.constant dense<0.000000e+00> : vector<8x128xf32>
    %142 = vector.multi_reduction <add>, %141, %cst_124 [0] : vector<8x8x128xf32> to vector<8x128xf32>
    %143 = arith.addf %139, %142 : vector<8x128xf32>
    %c0_125 = arith.constant 0 : index
    %c20_126 = arith.constant 20 : index
    %c0_127 = arith.constant 0 : index
    %c0_128 = arith.constant 0 : index
    %144 = vector.load %arg4[%c0_125, %c20_126, %c0_127, %c0_128] : memref<1x48x8x128xf32, #tpu.memory_space<vmem>>, vector<1x1x8x128xf32>
    %145 = vector.shape_cast %144 : vector<1x1x8x128xf32> to vector<8x128xf32>
    %146 = vector.shape_cast %143 : vector<8x128xf32> to vector<1x1x8x128xf32>
    tpu.vector_store %arg4[%c0_125, %c20_126, %c0_127, %c0_128], %146 {strides = array<i32>} : memref<1x48x8x128xf32, #tpu.memory_space<vmem>>, vector<1x1x8x128xf32>,
    %c0_129 = arith.constant 0 : index
    %c36 = arith.constant 36 : index
    %c0_130 = arith.constant 0 : index
    %c0_131 = arith.constant 0 : index
    %147 = vector.load %arg4[%c0_129, %c36, %c0_130, %c0_131] : memref<1x48x8x128xf32, #tpu.memory_space<vmem>>, vector<1x1x8x128xf32>
    %148 = vector.shape_cast %147 : vector<1x1x8x128xf32> to vector<8x128xf32>
    %cst_132 = arith.constant 0.000000e+00 : f32
    %149 = vector.broadcast %cst_132 : f32 to vector<8x8x128xf32>
    %150 = arith.select %128, %7, %149 : vector<8x8x128xi1>, vector<8x8x128xf32>
    %cst_133 = arith.constant dense<0.000000e+00> : vector<8x128xf32>
    %151 = vector.multi_reduction <add>, %150, %cst_133 [0] : vector<8x8x128xf32> to vector<8x128xf32>
    %152 = arith.addf %148, %151 : vector<8x128xf32>
    %c0_134 = arith.constant 0 : index
    %c36_135 = arith.constant 36 : index
    %c0_136 = arith.constant 0 : index
    %c0_137 = arith.constant 0 : index
    %153 = vector.load %arg4[%c0_134, %c36_135, %c0_136, %c0_137] : memref<1x48x8x128xf32, #tpu.memory_space<vmem>>, vector<1x1x8x128xf32>
    %154 = vector.shape_cast %153 : vector<1x1x8x128xf32> to vector<8x128xf32>
    %155 = vector.shape_cast %152 : vector<8x128xf32> to vector<1x1x8x128xf32>
    tpu.vector_store %arg4[%c0_134, %c36_135, %c0_136, %c0_137], %155 {strides = array<i32>} : memref<1x48x8x128xf32, #tpu.memory_space<vmem>>, vector<1x1x8x128xf32>,
    %cst_138 = arith.constant 0.333333343 : f32
    %156 = vector.broadcast %cst_138 : f32 to vector<8x8x128xf32>
    %157 = arith.cmpf ogt, %7, %156 : vector<8x8x128xf32>
    %c0_139 = arith.constant 0 : index
    %c5 = arith.constant 5 : index
    %c0_140 = arith.constant 0 : index
    %c0_141 = arith.constant 0 : index
    %158 = vector.load %arg4[%c0_139, %c5, %c0_140, %c0_141] : memref<1x48x8x128xf32, #tpu.memory_space<vmem>>, vector<1x1x8x128xf32>
    %159 = vector.shape_cast %158 : vector<1x1x8x128xf32> to vector<8x128xf32>
    %160 = arith.extui %157 : vector<8x8x128xi1> to vector<8x8x128xi32>
    %161 = arith.sitofp %160 : vector<8x8x128xi32> to vector<8x8x128xf32>
    %cst_142 = arith.constant dense<0.000000e+00> : vector<8x128xf32>
    %162 = vector.multi_reduction <add>, %161, %cst_142 [0] : vector<8x8x128xf32> to vector<8x128xf32>
    %163 = arith.addf %159, %162 : vector<8x128xf32>
    %c0_143 = arith.constant 0 : index
    %c5_144 = arith.constant 5 : index
    %c0_145 = arith.constant 0 : index
    %c0_146 = arith.constant 0 : index
    %164 = vector.load %arg4[%c0_143, %c5_144, %c0_145, %c0_146] : memref<1x48x8x128xf32, #tpu.memory_space<vmem>>, vector<1x1x8x128xf32>
    %165 = vector.shape_cast %164 : vector<1x1x8x128xf32> to vector<8x128xf32>
    %166 = vector.shape_cast %163 : vector<8x128xf32> to vector<1x1x8x128xf32>
    tpu.vector_store %arg4[%c0_143, %c5_144, %c0_145, %c0_146], %166 {strides = array<i32>} : memref<1x48x8x128xf32, #tpu.memory_space<vmem>>, vector<1x1x8x128xf32>,
    %c0_147 = arith.constant 0 : index
    %c21 = arith.constant 21 : index
    %c0_148 = arith.constant 0 : index
    %c0_149 = arith.constant 0 : index
    %167 = vector.load %arg4[%c0_147, %c21, %c0_148, %c0_149] : memref<1x48x8x128xf32, #tpu.memory_space<vmem>>, vector<1x1x8x128xf32>
    %168 = vector.shape_cast %167 : vector<1x1x8x128xf32> to vector<8x128xf32>
    %cst_150 = arith.constant 0.000000e+00 : f32
    %169 = vector.broadcast %cst_150 : f32 to vector<8x8x128xf32>
    %170 = arith.select %157, %10, %169 : vector<8x8x128xi1>, vector<8x8x128xf32>
    %cst_151 = arith.constant dense<0.000000e+00> : vector<8x128xf32>
    %171 = vector.multi_reduction <add>, %170, %cst_151 [0] : vector<8x8x128xf32> to vector<8x128xf32>
    %172 = arith.addf %168, %171 : vector<8x128xf32>
    %c0_152 = arith.constant 0 : index
    %c21_153 = arith.constant 21 : index
    %c0_154 = arith.constant 0 : index
    %c0_155 = arith.constant 0 : index
    %173 = vector.load %arg4[%c0_152, %c21_153, %c0_154, %c0_155] : memref<1x48x8x128xf32, #tpu.memory_space<vmem>>, vector<1x1x8x128xf32>
    %174 = vector.shape_cast %173 : vector<1x1x8x128xf32> to vector<8x128xf32>
    %175 = vector.shape_cast %172 : vector<8x128xf32> to vector<1x1x8x128xf32>
    tpu.vector_store %arg4[%c0_152, %c21_153, %c0_154, %c0_155], %175 {strides = array<i32>} : memref<1x48x8x128xf32, #tpu.memory_space<vmem>>, vector<1x1x8x128xf32>,
    %c0_156 = arith.constant 0 : index
    %c37 = arith.constant 37 : index
    %c0_157 = arith.constant 0 : index
    %c0_158 = arith.constant 0 : index
    %176 = vector.load %arg4[%c0_156, %c37, %c0_157, %c0_158] : memref<1x48x8x128xf32, #tpu.memory_space<vmem>>, vector<1x1x8x128xf32>
    %177 = vector.shape_cast %176 : vector<1x1x8x128xf32> to vector<8x128xf32>
    %cst_159 = arith.constant 0.000000e+00 : f32
    %178 = vector.broadcast %cst_159 : f32 to vector<8x8x128xf32>
    %179 = arith.select %157, %7, %178 : vector<8x8x128xi1>, vector<8x8x128xf32>
    %cst_160 = arith.constant dense<0.000000e+00> : vector<8x128xf32>
    %180 = vector.multi_reduction <add>, %179, %cst_160 [0] : vector<8x8x128xf32> to vector<8x128xf32>
    %181 = arith.addf %177, %180 : vector<8x128xf32>
    %c0_161 = arith.constant 0 : index
    %c37_162 = arith.constant 37 : index
    %c0_163 = arith.constant 0 : index
    %c0_164 = arith.constant 0 : index
    %182 = vector.load %arg4[%c0_161, %c37_162, %c0_163, %c0_164] : memref<1x48x8x128xf32, #tpu.memory_space<vmem>>, vector<1x1x8x128xf32>
    %183 = vector.shape_cast %182 : vector<1x1x8x128xf32> to vector<8x128xf32>
    %184 = vector.shape_cast %181 : vector<8x128xf32> to vector<1x1x8x128xf32>
    tpu.vector_store %arg4[%c0_161, %c37_162, %c0_163, %c0_164], %184 {strides = array<i32>} : memref<1x48x8x128xf32, #tpu.memory_space<vmem>>, vector<1x1x8x128xf32>,
    %cst_165 = arith.constant 4.000000e-01 : f32
    %185 = vector.broadcast %cst_165 : f32 to vector<8x8x128xf32>
    %186 = arith.cmpf ogt, %7, %185 : vector<8x8x128xf32>
    %c0_166 = arith.constant 0 : index
    %c6 = arith.constant 6 : index
    %c0_167 = arith.constant 0 : index
    %c0_168 = arith.constant 0 : index
    %187 = vector.load %arg4[%c0_166, %c6, %c0_167, %c0_168] : memref<1x48x8x128xf32, #tpu.memory_space<vmem>>, vector<1x1x8x128xf32>
    %188 = vector.shape_cast %187 : vector<1x1x8x128xf32> to vector<8x128xf32>
    %189 = arith.extui %186 : vector<8x8x128xi1> to vector<8x8x128xi32>
    %190 = arith.sitofp %189 : vector<8x8x128xi32> to vector<8x8x128xf32>
    %cst_169 = arith.constant dense<0.000000e+00> : vector<8x128xf32>
    %191 = vector.multi_reduction <add>, %190, %cst_169 [0] : vector<8x8x128xf32> to vector<8x128xf32>
    %192 = arith.addf %188, %191 : vector<8x128xf32>
    %c0_170 = arith.constant 0 : index
    %c6_171 = arith.constant 6 : index
    %c0_172 = arith.constant 0 : index
    %c0_173 = arith.constant 0 : index
    %193 = vector.load %arg4[%c0_170, %c6_171, %c0_172, %c0_173] : memref<1x48x8x128xf32, #tpu.memory_space<vmem>>, vector<1x1x8x128xf32>
    %194 = vector.shape_cast %193 : vector<1x1x8x128xf32> to vector<8x128xf32>
    %195 = vector.shape_cast %192 : vector<8x128xf32> to vector<1x1x8x128xf32>
    tpu.vector_store %arg4[%c0_170, %c6_171, %c0_172, %c0_173], %195 {strides = array<i32>} : memref<1x48x8x128xf32, #tpu.memory_space<vmem>>, vector<1x1x8x128xf32>,
    %c0_174 = arith.constant 0 : index
    %c22 = arith.constant 22 : index
    %c0_175 = arith.constant 0 : index
    %c0_176 = arith.constant 0 : index
    %196 = vector.load %arg4[%c0_174, %c22, %c0_175, %c0_176] : memref<1x48x8x128xf32, #tpu.memory_space<vmem>>, vector<1x1x8x128xf32>
    %197 = vector.shape_cast %196 : vector<1x1x8x128xf32> to vector<8x128xf32>
    %cst_177 = arith.constant 0.000000e+00 : f32
    %198 = vector.broadcast %cst_177 : f32 to vector<8x8x128xf32>
    %199 = arith.select %186, %10, %198 : vector<8x8x128xi1>, vector<8x8x128xf32>
    %cst_178 = arith.constant dense<0.000000e+00> : vector<8x128xf32>
    %200 = vector.multi_reduction <add>, %199, %cst_178 [0] : vector<8x8x128xf32> to vector<8x128xf32>
    %201 = arith.addf %197, %200 : vector<8x128xf32>
    %c0_179 = arith.constant 0 : index
    %c22_180 = arith.constant 22 : index
    %c0_181 = arith.constant 0 : index
    %c0_182 = arith.constant 0 : index
    %202 = vector.load %arg4[%c0_179, %c22_180, %c0_181, %c0_182] : memref<1x48x8x128xf32, #tpu.memory_space<vmem>>, vector<1x1x8x128xf32>
    %203 = vector.shape_cast %202 : vector<1x1x8x128xf32> to vector<8x128xf32>
    %204 = vector.shape_cast %201 : vector<8x128xf32> to vector<1x1x8x128xf32>
    tpu.vector_store %arg4[%c0_179, %c22_180, %c0_181, %c0_182], %204 {strides = array<i32>} : memref<1x48x8x128xf32, #tpu.memory_space<vmem>>, vector<1x1x8x128xf32>,
    %c0_183 = arith.constant 0 : index
    %c38 = arith.constant 38 : index
    %c0_184 = arith.constant 0 : index
    %c0_185 = arith.constant 0 : index
    %205 = vector.load %arg4[%c0_183, %c38, %c0_184, %c0_185] : memref<1x48x8x128xf32, #tpu.memory_space<vmem>>, vector<1x1x8x128xf32>
    %206 = vector.shape_cast %205 : vector<1x1x8x128xf32> to vector<8x128xf32>
    %cst_186 = arith.constant 0.000000e+00 : f32
    %207 = vector.broadcast %cst_186 : f32 to vector<8x8x128xf32>
    %208 = arith.select %186, %7, %207 : vector<8x8x128xi1>, vector<8x8x128xf32>
    %cst_187 = arith.constant dense<0.000000e+00> : vector<8x128xf32>
    %209 = vector.multi_reduction <add>, %208, %cst_187 [0] : vector<8x8x128xf32> to vector<8x128xf32>
    %210 = arith.addf %206, %209 : vector<8x128xf32>
    %c0_188 = arith.constant 0 : index
    %c38_189 = arith.constant 38 : index
    %c0_190 = arith.constant 0 : index
    %c0_191 = arith.constant 0 : index
    %211 = vector.load %arg4[%c0_188, %c38_189, %c0_190, %c0_191] : memref<1x48x8x128xf32, #tpu.memory_space<vmem>>, vector<1x1x8x128xf32>
    %212 = vector.shape_cast %211 : vector<1x1x8x128xf32> to vector<8x128xf32>
    %213 = vector.shape_cast %210 : vector<8x128xf32> to vector<1x1x8x128xf32>
    tpu.vector_store %arg4[%c0_188, %c38_189, %c0_190, %c0_191], %213 {strides = array<i32>} : memref<1x48x8x128xf32, #tpu.memory_space<vmem>>, vector<1x1x8x128xf32>,
    %cst_192 = arith.constant 0.466666669 : f32
    %214 = vector.broadcast %cst_192 : f32 to vector<8x8x128xf32>
    %215 = arith.cmpf ogt, %7, %214 : vector<8x8x128xf32>
    %c0_193 = arith.constant 0 : index
    %c7 = arith.constant 7 : index
    %c0_194 = arith.constant 0 : index
    %c0_195 = arith.constant 0 : index
    %216 = vector.load %arg4[%c0_193, %c7, %c0_194, %c0_195] : memref<1x48x8x128xf32, #tpu.memory_space<vmem>>, vector<1x1x8x128xf32>
    %217 = vector.shape_cast %216 : vector<1x1x8x128xf32> to vector<8x128xf32>
    %218 = arith.extui %215 : vector<8x8x128xi1> to vector<8x8x128xi32>
    %219 = arith.sitofp %218 : vector<8x8x128xi32> to vector<8x8x128xf32>
    %cst_196 = arith.constant dense<0.000000e+00> : vector<8x128xf32>
    %220 = vector.multi_reduction <add>, %219, %cst_196 [0] : vector<8x8x128xf32> to vector<8x128xf32>
    %221 = arith.addf %217, %220 : vector<8x128xf32>
    %c0_197 = arith.constant 0 : index
    %c7_198 = arith.constant 7 : index
    %c0_199 = arith.constant 0 : index
    %c0_200 = arith.constant 0 : index
    %222 = vector.load %arg4[%c0_197, %c7_198, %c0_199, %c0_200] : memref<1x48x8x128xf32, #tpu.memory_space<vmem>>, vector<1x1x8x128xf32>
    %223 = vector.shape_cast %222 : vector<1x1x8x128xf32> to vector<8x128xf32>
    %224 = vector.shape_cast %221 : vector<8x128xf32> to vector<1x1x8x128xf32>
    tpu.vector_store %arg4[%c0_197, %c7_198, %c0_199, %c0_200], %224 {strides = array<i32>} : memref<1x48x8x128xf32, #tpu.memory_space<vmem>>, vector<1x1x8x128xf32>,
    %c0_201 = arith.constant 0 : index
    %c23 = arith.constant 23 : index
    %c0_202 = arith.constant 0 : index
    %c0_203 = arith.constant 0 : index
    %225 = vector.load %arg4[%c0_201, %c23, %c0_202, %c0_203] : memref<1x48x8x128xf32, #tpu.memory_space<vmem>>, vector<1x1x8x128xf32>
    %226 = vector.shape_cast %225 : vector<1x1x8x128xf32> to vector<8x128xf32>
    %cst_204 = arith.constant 0.000000e+00 : f32
    %227 = vector.broadcast %cst_204 : f32 to vector<8x8x128xf32>
    %228 = arith.select %215, %10, %227 : vector<8x8x128xi1>, vector<8x8x128xf32>
    %cst_205 = arith.constant dense<0.000000e+00> : vector<8x128xf32>
    %229 = vector.multi_reduction <add>, %228, %cst_205 [0] : vector<8x8x128xf32> to vector<8x128xf32>
    %230 = arith.addf %226, %229 : vector<8x128xf32>
    %c0_206 = arith.constant 0 : index
    %c23_207 = arith.constant 23 : index
    %c0_208 = arith.constant 0 : index
    %c0_209 = arith.constant 0 : index
    %231 = vector.load %arg4[%c0_206, %c23_207, %c0_208, %c0_209] : memref<1x48x8x128xf32, #tpu.memory_space<vmem>>, vector<1x1x8x128xf32>
    %232 = vector.shape_cast %231 : vector<1x1x8x128xf32> to vector<8x128xf32>
    %233 = vector.shape_cast %230 : vector<8x128xf32> to vector<1x1x8x128xf32>
    tpu.vector_store %arg4[%c0_206, %c23_207, %c0_208, %c0_209], %233 {strides = array<i32>} : memref<1x48x8x128xf32, #tpu.memory_space<vmem>>, vector<1x1x8x128xf32>,
    %c0_210 = arith.constant 0 : index
    %c39 = arith.constant 39 : index
    %c0_211 = arith.constant 0 : index
    %c0_212 = arith.constant 0 : index
    %234 = vector.load %arg4[%c0_210, %c39, %c0_211, %c0_212] : memref<1x48x8x128xf32, #tpu.memory_space<vmem>>, vector<1x1x8x128xf32>
    %235 = vector.shape_cast %234 : vector<1x1x8x128xf32> to vector<8x128xf32>
    %cst_213 = arith.constant 0.000000e+00 : f32
    %236 = vector.broadcast %cst_213 : f32 to vector<8x8x128xf32>
    %237 = arith.select %215, %7, %236 : vector<8x8x128xi1>, vector<8x8x128xf32>
    %cst_214 = arith.constant dense<0.000000e+00> : vector<8x128xf32>
    %238 = vector.multi_reduction <add>, %237, %cst_214 [0] : vector<8x8x128xf32> to vector<8x128xf32>
    %239 = arith.addf %235, %238 : vector<8x128xf32>
    %c0_215 = arith.constant 0 : index
    %c39_216 = arith.constant 39 : index
    %c0_217 = arith.constant 0 : index
    %c0_218 = arith.constant 0 : index
    %240 = vector.load %arg4[%c0_215, %c39_216, %c0_217, %c0_218] : memref<1x48x8x128xf32, #tpu.memory_space<vmem>>, vector<1x1x8x128xf32>
    %241 = vector.shape_cast %240 : vector<1x1x8x128xf32> to vector<8x128xf32>
    %242 = vector.shape_cast %239 : vector<8x128xf32> to vector<1x1x8x128xf32>
    tpu.vector_store %arg4[%c0_215, %c39_216, %c0_217, %c0_218], %242 {strides = array<i32>} : memref<1x48x8x128xf32, #tpu.memory_space<vmem>>, vector<1x1x8x128xf32>,
    %cst_219 = arith.constant 0.533333361 : f32
    %243 = vector.broadcast %cst_219 : f32 to vector<8x8x128xf32>
    %244 = arith.cmpf ogt, %7, %243 : vector<8x8x128xf32>
    %c0_220 = arith.constant 0 : index
    %c8 = arith.constant 8 : index
    %c0_221 = arith.constant 0 : index
    %c0_222 = arith.constant 0 : index
    %245 = vector.load %arg4[%c0_220, %c8, %c0_221, %c0_222] : memref<1x48x8x128xf32, #tpu.memory_space<vmem>>, vector<1x1x8x128xf32>
    %246 = vector.shape_cast %245 : vector<1x1x8x128xf32> to vector<8x128xf32>
    %247 = arith.extui %244 : vector<8x8x128xi1> to vector<8x8x128xi32>
    %248 = arith.sitofp %247 : vector<8x8x128xi32> to vector<8x8x128xf32>
    %cst_223 = arith.constant dense<0.000000e+00> : vector<8x128xf32>
    %249 = vector.multi_reduction <add>, %248, %cst_223 [0] : vector<8x8x128xf32> to vector<8x128xf32>
    %250 = arith.addf %246, %249 : vector<8x128xf32>
    %c0_224 = arith.constant 0 : index
    %c8_225 = arith.constant 8 : index
    %c0_226 = arith.constant 0 : index
    %c0_227 = arith.constant 0 : index
    %251 = vector.load %arg4[%c0_224, %c8_225, %c0_226, %c0_227] : memref<1x48x8x128xf32, #tpu.memory_space<vmem>>, vector<1x1x8x128xf32>
    %252 = vector.shape_cast %251 : vector<1x1x8x128xf32> to vector<8x128xf32>
    %253 = vector.shape_cast %250 : vector<8x128xf32> to vector<1x1x8x128xf32>
    tpu.vector_store %arg4[%c0_224, %c8_225, %c0_226, %c0_227], %253 {strides = array<i32>} : memref<1x48x8x128xf32, #tpu.memory_space<vmem>>, vector<1x1x8x128xf32>,
    %c0_228 = arith.constant 0 : index
    %c24 = arith.constant 24 : index
    %c0_229 = arith.constant 0 : index
    %c0_230 = arith.constant 0 : index
    %254 = vector.load %arg4[%c0_228, %c24, %c0_229, %c0_230] : memref<1x48x8x128xf32, #tpu.memory_space<vmem>>, vector<1x1x8x128xf32>
    %255 = vector.shape_cast %254 : vector<1x1x8x128xf32> to vector<8x128xf32>
    %cst_231 = arith.constant 0.000000e+00 : f32
    %256 = vector.broadcast %cst_231 : f32 to vector<8x8x128xf32>
    %257 = arith.select %244, %10, %256 : vector<8x8x128xi1>, vector<8x8x128xf32>
    %cst_232 = arith.constant dense<0.000000e+00> : vector<8x128xf32>
    %258 = vector.multi_reduction <add>, %257, %cst_232 [0] : vector<8x8x128xf32> to vector<8x128xf32>
    %259 = arith.addf %255, %258 : vector<8x128xf32>
    %c0_233 = arith.constant 0 : index
    %c24_234 = arith.constant 24 : index
    %c0_235 = arith.constant 0 : index
    %c0_236 = arith.constant 0 : index
    %260 = vector.load %arg4[%c0_233, %c24_234, %c0_235, %c0_236] : memref<1x48x8x128xf32, #tpu.memory_space<vmem>>, vector<1x1x8x128xf32>
    %261 = vector.shape_cast %260 : vector<1x1x8x128xf32> to vector<8x128xf32>
    %262 = vector.shape_cast %259 : vector<8x128xf32> to vector<1x1x8x128xf32>
    tpu.vector_store %arg4[%c0_233, %c24_234, %c0_235, %c0_236], %262 {strides = array<i32>} : memref<1x48x8x128xf32, #tpu.memory_space<vmem>>, vector<1x1x8x128xf32>,
    %c0_237 = arith.constant 0 : index
    %c40 = arith.constant 40 : index
    %c0_238 = arith.constant 0 : index
    %c0_239 = arith.constant 0 : index
    %263 = vector.load %arg4[%c0_237, %c40, %c0_238, %c0_239] : memref<1x48x8x128xf32, #tpu.memory_space<vmem>>, vector<1x1x8x128xf32>
    %264 = vector.shape_cast %263 : vector<1x1x8x128xf32> to vector<8x128xf32>
    %cst_240 = arith.constant 0.000000e+00 : f32
    %265 = vector.broadcast %cst_240 : f32 to vector<8x8x128xf32>
    %266 = arith.select %244, %7, %265 : vector<8x8x128xi1>, vector<8x8x128xf32>
    %cst_241 = arith.constant dense<0.000000e+00> : vector<8x128xf32>
    %267 = vector.multi_reduction <add>, %266, %cst_241 [0] : vector<8x8x128xf32> to vector<8x128xf32>
    %268 = arith.addf %264, %267 : vector<8x128xf32>
    %c0_242 = arith.constant 0 : index
    %c40_243 = arith.constant 40 : index
    %c0_244 = arith.constant 0 : index
    %c0_245 = arith.constant 0 : index
    %269 = vector.load %arg4[%c0_242, %c40_243, %c0_244, %c0_245] : memref<1x48x8x128xf32, #tpu.memory_space<vmem>>, vector<1x1x8x128xf32>
    %270 = vector.shape_cast %269 : vector<1x1x8x128xf32> to vector<8x128xf32>
    %271 = vector.shape_cast %268 : vector<8x128xf32> to vector<1x1x8x128xf32>
    tpu.vector_store %arg4[%c0_242, %c40_243, %c0_244, %c0_245], %271 {strides = array<i32>} : memref<1x48x8x128xf32, #tpu.memory_space<vmem>>, vector<1x1x8x128xf32>,
    %cst_246 = arith.constant 6.000000e-01 : f32
    %272 = vector.broadcast %cst_246 : f32 to vector<8x8x128xf32>
    %273 = arith.cmpf ogt, %7, %272 : vector<8x8x128xf32>
    %c0_247 = arith.constant 0 : index
    %c9 = arith.constant 9 : index
    %c0_248 = arith.constant 0 : index
    %c0_249 = arith.constant 0 : index
    %274 = vector.load %arg4[%c0_247, %c9, %c0_248, %c0_249] : memref<1x48x8x128xf32, #tpu.memory_space<vmem>>, vector<1x1x8x128xf32>
    %275 = vector.shape_cast %274 : vector<1x1x8x128xf32> to vector<8x128xf32>
    %276 = arith.extui %273 : vector<8x8x128xi1> to vector<8x8x128xi32>
    %277 = arith.sitofp %276 : vector<8x8x128xi32> to vector<8x8x128xf32>
    %cst_250 = arith.constant dense<0.000000e+00> : vector<8x128xf32>
    %278 = vector.multi_reduction <add>, %277, %cst_250 [0] : vector<8x8x128xf32> to vector<8x128xf32>
    %279 = arith.addf %275, %278 : vector<8x128xf32>
    %c0_251 = arith.constant 0 : index
    %c9_252 = arith.constant 9 : index
    %c0_253 = arith.constant 0 : index
    %c0_254 = arith.constant 0 : index
    %280 = vector.load %arg4[%c0_251, %c9_252, %c0_253, %c0_254] : memref<1x48x8x128xf32, #tpu.memory_space<vmem>>, vector<1x1x8x128xf32>
    %281 = vector.shape_cast %280 : vector<1x1x8x128xf32> to vector<8x128xf32>
    %282 = vector.shape_cast %279 : vector<8x128xf32> to vector<1x1x8x128xf32>
    tpu.vector_store %arg4[%c0_251, %c9_252, %c0_253, %c0_254], %282 {strides = array<i32>} : memref<1x48x8x128xf32, #tpu.memory_space<vmem>>, vector<1x1x8x128xf32>,
    %c0_255 = arith.constant 0 : index
    %c25 = arith.constant 25 : index
    %c0_256 = arith.constant 0 : index
    %c0_257 = arith.constant 0 : index
    %283 = vector.load %arg4[%c0_255, %c25, %c0_256, %c0_257] : memref<1x48x8x128xf32, #tpu.memory_space<vmem>>, vector<1x1x8x128xf32>
    %284 = vector.shape_cast %283 : vector<1x1x8x128xf32> to vector<8x128xf32>
    %cst_258 = arith.constant 0.000000e+00 : f32
    %285 = vector.broadcast %cst_258 : f32 to vector<8x8x128xf32>
    %286 = arith.select %273, %10, %285 : vector<8x8x128xi1>, vector<8x8x128xf32>
    %cst_259 = arith.constant dense<0.000000e+00> : vector<8x128xf32>
    %287 = vector.multi_reduction <add>, %286, %cst_259 [0] : vector<8x8x128xf32> to vector<8x128xf32>
    %288 = arith.addf %284, %287 : vector<8x128xf32>
    %c0_260 = arith.constant 0 : index
    %c25_261 = arith.constant 25 : index
    %c0_262 = arith.constant 0 : index
    %c0_263 = arith.constant 0 : index
    %289 = vector.load %arg4[%c0_260, %c25_261, %c0_262, %c0_263] : memref<1x48x8x128xf32, #tpu.memory_space<vmem>>, vector<1x1x8x128xf32>
    %290 = vector.shape_cast %289 : vector<1x1x8x128xf32> to vector<8x128xf32>
    %291 = vector.shape_cast %288 : vector<8x128xf32> to vector<1x1x8x128xf32>
    tpu.vector_store %arg4[%c0_260, %c25_261, %c0_262, %c0_263], %291 {strides = array<i32>} : memref<1x48x8x128xf32, #tpu.memory_space<vmem>>, vector<1x1x8x128xf32>,
    %c0_264 = arith.constant 0 : index
    %c41 = arith.constant 41 : index
    %c0_265 = arith.constant 0 : index
    %c0_266 = arith.constant 0 : index
    %292 = vector.load %arg4[%c0_264, %c41, %c0_265, %c0_266] : memref<1x48x8x128xf32, #tpu.memory_space<vmem>>, vector<1x1x8x128xf32>
    %293 = vector.shape_cast %292 : vector<1x1x8x128xf32> to vector<8x128xf32>
    %cst_267 = arith.constant 0.000000e+00 : f32
    %294 = vector.broadcast %cst_267 : f32 to vector<8x8x128xf32>
    %295 = arith.select %273, %7, %294 : vector<8x8x128xi1>, vector<8x8x128xf32>
    %cst_268 = arith.constant dense<0.000000e+00> : vector<8x128xf32>
    %296 = vector.multi_reduction <add>, %295, %cst_268 [0] : vector<8x8x128xf32> to vector<8x128xf32>
    %297 = arith.addf %293, %296 : vector<8x128xf32>
    %c0_269 = arith.constant 0 : index
    %c41_270 = arith.constant 41 : index
    %c0_271 = arith.constant 0 : index
    %c0_272 = arith.constant 0 : index
    %298 = vector.load %arg4[%c0_269, %c41_270, %c0_271, %c0_272] : memref<1x48x8x128xf32, #tpu.memory_space<vmem>>, vector<1x1x8x128xf32>
    %299 = vector.shape_cast %298 : vector<1x1x8x128xf32> to vector<8x128xf32>
    %300 = vector.shape_cast %297 : vector<8x128xf32> to vector<1x1x8x128xf32>
    tpu.vector_store %arg4[%c0_269, %c41_270, %c0_271, %c0_272], %300 {strides = array<i32>} : memref<1x48x8x128xf32, #tpu.memory_space<vmem>>, vector<1x1x8x128xf32>,
    %cst_273 = arith.constant 0.666666686 : f32
    %301 = vector.broadcast %cst_273 : f32 to vector<8x8x128xf32>
    %302 = arith.cmpf ogt, %7, %301 : vector<8x8x128xf32>
    %c0_274 = arith.constant 0 : index
    %c10 = arith.constant 10 : index
    %c0_275 = arith.constant 0 : index
    %c0_276 = arith.constant 0 : index
    %303 = vector.load %arg4[%c0_274, %c10, %c0_275, %c0_276] : memref<1x48x8x128xf32, #tpu.memory_space<vmem>>, vector<1x1x8x128xf32>
    %304 = vector.shape_cast %303 : vector<1x1x8x128xf32> to vector<8x128xf32>
    %305 = arith.extui %302 : vector<8x8x128xi1> to vector<8x8x128xi32>
    %306 = arith.sitofp %305 : vector<8x8x128xi32> to vector<8x8x128xf32>
    %cst_277 = arith.constant dense<0.000000e+00> : vector<8x128xf32>
    %307 = vector.multi_reduction <add>, %306, %cst_277 [0] : vector<8x8x128xf32> to vector<8x128xf32>
    %308 = arith.addf %304, %307 : vector<8x128xf32>
    %c0_278 = arith.constant 0 : index
    %c10_279 = arith.constant 10 : index
    %c0_280 = arith.constant 0 : index
    %c0_281 = arith.constant 0 : index
    %309 = vector.load %arg4[%c0_278, %c10_279, %c0_280, %c0_281] : memref<1x48x8x128xf32, #tpu.memory_space<vmem>>, vector<1x1x8x128xf32>
    %310 = vector.shape_cast %309 : vector<1x1x8x128xf32> to vector<8x128xf32>
    %311 = vector.shape_cast %308 : vector<8x128xf32> to vector<1x1x8x128xf32>
    tpu.vector_store %arg4[%c0_278, %c10_279, %c0_280, %c0_281], %311 {strides = array<i32>} : memref<1x48x8x128xf32, #tpu.memory_space<vmem>>, vector<1x1x8x128xf32>,
    %c0_282 = arith.constant 0 : index
    %c26 = arith.constant 26 : index
    %c0_283 = arith.constant 0 : index
    %c0_284 = arith.constant 0 : index
    %312 = vector.load %arg4[%c0_282, %c26, %c0_283, %c0_284] : memref<1x48x8x128xf32, #tpu.memory_space<vmem>>, vector<1x1x8x128xf32>
    %313 = vector.shape_cast %312 : vector<1x1x8x128xf32> to vector<8x128xf32>
    %cst_285 = arith.constant 0.000000e+00 : f32
    %314 = vector.broadcast %cst_285 : f32 to vector<8x8x128xf32>
    %315 = arith.select %302, %10, %314 : vector<8x8x128xi1>, vector<8x8x128xf32>
    %cst_286 = arith.constant dense<0.000000e+00> : vector<8x128xf32>
    %316 = vector.multi_reduction <add>, %315, %cst_286 [0] : vector<8x8x128xf32> to vector<8x128xf32>
    %317 = arith.addf %313, %316 : vector<8x128xf32>
    %c0_287 = arith.constant 0 : index
    %c26_288 = arith.constant 26 : index
    %c0_289 = arith.constant 0 : index
    %c0_290 = arith.constant 0 : index
    %318 = vector.load %arg4[%c0_287, %c26_288, %c0_289, %c0_290] : memref<1x48x8x128xf32, #tpu.memory_space<vmem>>, vector<1x1x8x128xf32>
    %319 = vector.shape_cast %318 : vector<1x1x8x128xf32> to vector<8x128xf32>
    %320 = vector.shape_cast %317 : vector<8x128xf32> to vector<1x1x8x128xf32>
    tpu.vector_store %arg4[%c0_287, %c26_288, %c0_289, %c0_290], %320 {strides = array<i32>} : memref<1x48x8x128xf32, #tpu.memory_space<vmem>>, vector<1x1x8x128xf32>,
    %c0_291 = arith.constant 0 : index
    %c42 = arith.constant 42 : index
    %c0_292 = arith.constant 0 : index
    %c0_293 = arith.constant 0 : index
    %321 = vector.load %arg4[%c0_291, %c42, %c0_292, %c0_293] : memref<1x48x8x128xf32, #tpu.memory_space<vmem>>, vector<1x1x8x128xf32>
    %322 = vector.shape_cast %321 : vector<1x1x8x128xf32> to vector<8x128xf32>
    %cst_294 = arith.constant 0.000000e+00 : f32
    %323 = vector.broadcast %cst_294 : f32 to vector<8x8x128xf32>
    %324 = arith.select %302, %7, %323 : vector<8x8x128xi1>, vector<8x8x128xf32>
    %cst_295 = arith.constant dense<0.000000e+00> : vector<8x128xf32>
    %325 = vector.multi_reduction <add>, %324, %cst_295 [0] : vector<8x8x128xf32> to vector<8x128xf32>
    %326 = arith.addf %322, %325 : vector<8x128xf32>
    %c0_296 = arith.constant 0 : index
    %c42_297 = arith.constant 42 : index
    %c0_298 = arith.constant 0 : index
    %c0_299 = arith.constant 0 : index
    %327 = vector.load %arg4[%c0_296, %c42_297, %c0_298, %c0_299] : memref<1x48x8x128xf32, #tpu.memory_space<vmem>>, vector<1x1x8x128xf32>
    %328 = vector.shape_cast %327 : vector<1x1x8x128xf32> to vector<8x128xf32>
    %329 = vector.shape_cast %326 : vector<8x128xf32> to vector<1x1x8x128xf32>
    tpu.vector_store %arg4[%c0_296, %c42_297, %c0_298, %c0_299], %329 {strides = array<i32>} : memref<1x48x8x128xf32, #tpu.memory_space<vmem>>, vector<1x1x8x128xf32>,
    %cst_300 = arith.constant 0.733333349 : f32
    %330 = vector.broadcast %cst_300 : f32 to vector<8x8x128xf32>
    %331 = arith.cmpf ogt, %7, %330 : vector<8x8x128xf32>
    %c0_301 = arith.constant 0 : index
    %c11 = arith.constant 11 : index
    %c0_302 = arith.constant 0 : index
    %c0_303 = arith.constant 0 : index
    %332 = vector.load %arg4[%c0_301, %c11, %c0_302, %c0_303] : memref<1x48x8x128xf32, #tpu.memory_space<vmem>>, vector<1x1x8x128xf32>
    %333 = vector.shape_cast %332 : vector<1x1x8x128xf32> to vector<8x128xf32>
    %334 = arith.extui %331 : vector<8x8x128xi1> to vector<8x8x128xi32>
    %335 = arith.sitofp %334 : vector<8x8x128xi32> to vector<8x8x128xf32>
    %cst_304 = arith.constant dense<0.000000e+00> : vector<8x128xf32>
    %336 = vector.multi_reduction <add>, %335, %cst_304 [0] : vector<8x8x128xf32> to vector<8x128xf32>
    %337 = arith.addf %333, %336 : vector<8x128xf32>
    %c0_305 = arith.constant 0 : index
    %c11_306 = arith.constant 11 : index
    %c0_307 = arith.constant 0 : index
    %c0_308 = arith.constant 0 : index
    %338 = vector.load %arg4[%c0_305, %c11_306, %c0_307, %c0_308] : memref<1x48x8x128xf32, #tpu.memory_space<vmem>>, vector<1x1x8x128xf32>
    %339 = vector.shape_cast %338 : vector<1x1x8x128xf32> to vector<8x128xf32>
    %340 = vector.shape_cast %337 : vector<8x128xf32> to vector<1x1x8x128xf32>
    tpu.vector_store %arg4[%c0_305, %c11_306, %c0_307, %c0_308], %340 {strides = array<i32>} : memref<1x48x8x128xf32, #tpu.memory_space<vmem>>, vector<1x1x8x128xf32>,
    %c0_309 = arith.constant 0 : index
    %c27 = arith.constant 27 : index
    %c0_310 = arith.constant 0 : index
    %c0_311 = arith.constant 0 : index
    %341 = vector.load %arg4[%c0_309, %c27, %c0_310, %c0_311] : memref<1x48x8x128xf32, #tpu.memory_space<vmem>>, vector<1x1x8x128xf32>
    %342 = vector.shape_cast %341 : vector<1x1x8x128xf32> to vector<8x128xf32>
    %cst_312 = arith.constant 0.000000e+00 : f32
    %343 = vector.broadcast %cst_312 : f32 to vector<8x8x128xf32>
    %344 = arith.select %331, %10, %343 : vector<8x8x128xi1>, vector<8x8x128xf32>
    %cst_313 = arith.constant dense<0.000000e+00> : vector<8x128xf32>
    %345 = vector.multi_reduction <add>, %344, %cst_313 [0] : vector<8x8x128xf32> to vector<8x128xf32>
    %346 = arith.addf %342, %345 : vector<8x128xf32>
    %c0_314 = arith.constant 0 : index
    %c27_315 = arith.constant 27 : index
    %c0_316 = arith.constant 0 : index
    %c0_317 = arith.constant 0 : index
    %347 = vector.load %arg4[%c0_314, %c27_315, %c0_316, %c0_317] : memref<1x48x8x128xf32, #tpu.memory_space<vmem>>, vector<1x1x8x128xf32>
    %348 = vector.shape_cast %347 : vector<1x1x8x128xf32> to vector<8x128xf32>
    %349 = vector.shape_cast %346 : vector<8x128xf32> to vector<1x1x8x128xf32>
    tpu.vector_store %arg4[%c0_314, %c27_315, %c0_316, %c0_317], %349 {strides = array<i32>} : memref<1x48x8x128xf32, #tpu.memory_space<vmem>>, vector<1x1x8x128xf32>,
    %c0_318 = arith.constant 0 : index
    %c43 = arith.constant 43 : index
    %c0_319 = arith.constant 0 : index
    %c0_320 = arith.constant 0 : index
    %350 = vector.load %arg4[%c0_318, %c43, %c0_319, %c0_320] : memref<1x48x8x128xf32, #tpu.memory_space<vmem>>, vector<1x1x8x128xf32>
    %351 = vector.shape_cast %350 : vector<1x1x8x128xf32> to vector<8x128xf32>
    %cst_321 = arith.constant 0.000000e+00 : f32
    %352 = vector.broadcast %cst_321 : f32 to vector<8x8x128xf32>
    %353 = arith.select %331, %7, %352 : vector<8x8x128xi1>, vector<8x8x128xf32>
    %cst_322 = arith.constant dense<0.000000e+00> : vector<8x128xf32>
    %354 = vector.multi_reduction <add>, %353, %cst_322 [0] : vector<8x8x128xf32> to vector<8x128xf32>
    %355 = arith.addf %351, %354 : vector<8x128xf32>
    %c0_323 = arith.constant 0 : index
    %c43_324 = arith.constant 43 : index
    %c0_325 = arith.constant 0 : index
    %c0_326 = arith.constant 0 : index
    %356 = vector.load %arg4[%c0_323, %c43_324, %c0_325, %c0_326] : memref<1x48x8x128xf32, #tpu.memory_space<vmem>>, vector<1x1x8x128xf32>
    %357 = vector.shape_cast %356 : vector<1x1x8x128xf32> to vector<8x128xf32>
    %358 = vector.shape_cast %355 : vector<8x128xf32> to vector<1x1x8x128xf32>
    tpu.vector_store %arg4[%c0_323, %c43_324, %c0_325, %c0_326], %358 {strides = array<i32>} : memref<1x48x8x128xf32, #tpu.memory_space<vmem>>, vector<1x1x8x128xf32>,
    %cst_327 = arith.constant 8.000000e-01 : f32
    %359 = vector.broadcast %cst_327 : f32 to vector<8x8x128xf32>
    %360 = arith.cmpf ogt, %7, %359 : vector<8x8x128xf32>
    %c0_328 = arith.constant 0 : index
    %c12 = arith.constant 12 : index
    %c0_329 = arith.constant 0 : index
    %c0_330 = arith.constant 0 : index
    %361 = vector.load %arg4[%c0_328, %c12, %c0_329, %c0_330] : memref<1x48x8x128xf32, #tpu.memory_space<vmem>>, vector<1x1x8x128xf32>
    %362 = vector.shape_cast %361 : vector<1x1x8x128xf32> to vector<8x128xf32>
    %363 = arith.extui %360 : vector<8x8x128xi1> to vector<8x8x128xi32>
    %364 = arith.sitofp %363 : vector<8x8x128xi32> to vector<8x8x128xf32>
    %cst_331 = arith.constant dense<0.000000e+00> : vector<8x128xf32>
    %365 = vector.multi_reduction <add>, %364, %cst_331 [0] : vector<8x8x128xf32> to vector<8x128xf32>
    %366 = arith.addf %362, %365 : vector<8x128xf32>
    %c0_332 = arith.constant 0 : index
    %c12_333 = arith.constant 12 : index
    %c0_334 = arith.constant 0 : index
    %c0_335 = arith.constant 0 : index
    %367 = vector.load %arg4[%c0_332, %c12_333, %c0_334, %c0_335] : memref<1x48x8x128xf32, #tpu.memory_space<vmem>>, vector<1x1x8x128xf32>
    %368 = vector.shape_cast %367 : vector<1x1x8x128xf32> to vector<8x128xf32>
    %369 = vector.shape_cast %366 : vector<8x128xf32> to vector<1x1x8x128xf32>
    tpu.vector_store %arg4[%c0_332, %c12_333, %c0_334, %c0_335], %369 {strides = array<i32>} : memref<1x48x8x128xf32, #tpu.memory_space<vmem>>, vector<1x1x8x128xf32>,
    %c0_336 = arith.constant 0 : index
    %c28 = arith.constant 28 : index
    %c0_337 = arith.constant 0 : index
    %c0_338 = arith.constant 0 : index
    %370 = vector.load %arg4[%c0_336, %c28, %c0_337, %c0_338] : memref<1x48x8x128xf32, #tpu.memory_space<vmem>>, vector<1x1x8x128xf32>
    %371 = vector.shape_cast %370 : vector<1x1x8x128xf32> to vector<8x128xf32>
    %cst_339 = arith.constant 0.000000e+00 : f32
    %372 = vector.broadcast %cst_339 : f32 to vector<8x8x128xf32>
    %373 = arith.select %360, %10, %372 : vector<8x8x128xi1>, vector<8x8x128xf32>
    %cst_340 = arith.constant dense<0.000000e+00> : vector<8x128xf32>
    %374 = vector.multi_reduction <add>, %373, %cst_340 [0] : vector<8x8x128xf32> to vector<8x128xf32>
    %375 = arith.addf %371, %374 : vector<8x128xf32>
    %c0_341 = arith.constant 0 : index
    %c28_342 = arith.constant 28 : index
    %c0_343 = arith.constant 0 : index
    %c0_344 = arith.constant 0 : index
    %376 = vector.load %arg4[%c0_341, %c28_342, %c0_343, %c0_344] : memref<1x48x8x128xf32, #tpu.memory_space<vmem>>, vector<1x1x8x128xf32>
    %377 = vector.shape_cast %376 : vector<1x1x8x128xf32> to vector<8x128xf32>
    %378 = vector.shape_cast %375 : vector<8x128xf32> to vector<1x1x8x128xf32>
    tpu.vector_store %arg4[%c0_341, %c28_342, %c0_343, %c0_344], %378 {strides = array<i32>} : memref<1x48x8x128xf32, #tpu.memory_space<vmem>>, vector<1x1x8x128xf32>,
    %c0_345 = arith.constant 0 : index
    %c44 = arith.constant 44 : index
    %c0_346 = arith.constant 0 : index
    %c0_347 = arith.constant 0 : index
    %379 = vector.load %arg4[%c0_345, %c44, %c0_346, %c0_347] : memref<1x48x8x128xf32, #tpu.memory_space<vmem>>, vector<1x1x8x128xf32>
    %380 = vector.shape_cast %379 : vector<1x1x8x128xf32> to vector<8x128xf32>
    %cst_348 = arith.constant 0.000000e+00 : f32
    %381 = vector.broadcast %cst_348 : f32 to vector<8x8x128xf32>
    %382 = arith.select %360, %7, %381 : vector<8x8x128xi1>, vector<8x8x128xf32>
    %cst_349 = arith.constant dense<0.000000e+00> : vector<8x128xf32>
    %383 = vector.multi_reduction <add>, %382, %cst_349 [0] : vector<8x8x128xf32> to vector<8x128xf32>
    %384 = arith.addf %380, %383 : vector<8x128xf32>
    %c0_350 = arith.constant 0 : index
    %c44_351 = arith.constant 44 : index
    %c0_352 = arith.constant 0 : index
    %c0_353 = arith.constant 0 : index
    %385 = vector.load %arg4[%c0_350, %c44_351, %c0_352, %c0_353] : memref<1x48x8x128xf32, #tpu.memory_space<vmem>>, vector<1x1x8x128xf32>
    %386 = vector.shape_cast %385 : vector<1x1x8x128xf32> to vector<8x128xf32>
    %387 = vector.shape_cast %384 : vector<8x128xf32> to vector<1x1x8x128xf32>
    tpu.vector_store %arg4[%c0_350, %c44_351, %c0_352, %c0_353], %387 {strides = array<i32>} : memref<1x48x8x128xf32, #tpu.memory_space<vmem>>, vector<1x1x8x128xf32>,
    %cst_354 = arith.constant 0.866666674 : f32
    %388 = vector.broadcast %cst_354 : f32 to vector<8x8x128xf32>
    %389 = arith.cmpf ogt, %7, %388 : vector<8x8x128xf32>
    %c0_355 = arith.constant 0 : index
    %c13 = arith.constant 13 : index
    %c0_356 = arith.constant 0 : index
    %c0_357 = arith.constant 0 : index
    %390 = vector.load %arg4[%c0_355, %c13, %c0_356, %c0_357] : memref<1x48x8x128xf32, #tpu.memory_space<vmem>>, vector<1x1x8x128xf32>
    %391 = vector.shape_cast %390 : vector<1x1x8x128xf32> to vector<8x128xf32>
    %392 = arith.extui %389 : vector<8x8x128xi1> to vector<8x8x128xi32>
    %393 = arith.sitofp %392 : vector<8x8x128xi32> to vector<8x8x128xf32>
    %cst_358 = arith.constant dense<0.000000e+00> : vector<8x128xf32>
    %394 = vector.multi_reduction <add>, %393, %cst_358 [0] : vector<8x8x128xf32> to vector<8x128xf32>
    %395 = arith.addf %391, %394 : vector<8x128xf32>
    %c0_359 = arith.constant 0 : index
    %c13_360 = arith.constant 13 : index
    %c0_361 = arith.constant 0 : index
    %c0_362 = arith.constant 0 : index
    %396 = vector.load %arg4[%c0_359, %c13_360, %c0_361, %c0_362] : memref<1x48x8x128xf32, #tpu.memory_space<vmem>>, vector<1x1x8x128xf32>
    %397 = vector.shape_cast %396 : vector<1x1x8x128xf32> to vector<8x128xf32>
    %398 = vector.shape_cast %395 : vector<8x128xf32> to vector<1x1x8x128xf32>
    tpu.vector_store %arg4[%c0_359, %c13_360, %c0_361, %c0_362], %398 {strides = array<i32>} : memref<1x48x8x128xf32, #tpu.memory_space<vmem>>, vector<1x1x8x128xf32>,
    %c0_363 = arith.constant 0 : index
    %c29 = arith.constant 29 : index
    %c0_364 = arith.constant 0 : index
    %c0_365 = arith.constant 0 : index
    %399 = vector.load %arg4[%c0_363, %c29, %c0_364, %c0_365] : memref<1x48x8x128xf32, #tpu.memory_space<vmem>>, vector<1x1x8x128xf32>
    %400 = vector.shape_cast %399 : vector<1x1x8x128xf32> to vector<8x128xf32>
    %cst_366 = arith.constant 0.000000e+00 : f32
    %401 = vector.broadcast %cst_366 : f32 to vector<8x8x128xf32>
    %402 = arith.select %389, %10, %401 : vector<8x8x128xi1>, vector<8x8x128xf32>
    %cst_367 = arith.constant dense<0.000000e+00> : vector<8x128xf32>
    %403 = vector.multi_reduction <add>, %402, %cst_367 [0] : vector<8x8x128xf32> to vector<8x128xf32>
    %404 = arith.addf %400, %403 : vector<8x128xf32>
    %c0_368 = arith.constant 0 : index
    %c29_369 = arith.constant 29 : index
    %c0_370 = arith.constant 0 : index
    %c0_371 = arith.constant 0 : index
    %405 = vector.load %arg4[%c0_368, %c29_369, %c0_370, %c0_371] : memref<1x48x8x128xf32, #tpu.memory_space<vmem>>, vector<1x1x8x128xf32>
    %406 = vector.shape_cast %405 : vector<1x1x8x128xf32> to vector<8x128xf32>
    %407 = vector.shape_cast %404 : vector<8x128xf32> to vector<1x1x8x128xf32>
    tpu.vector_store %arg4[%c0_368, %c29_369, %c0_370, %c0_371], %407 {strides = array<i32>} : memref<1x48x8x128xf32, #tpu.memory_space<vmem>>, vector<1x1x8x128xf32>,
    %c0_372 = arith.constant 0 : index
    %c45 = arith.constant 45 : index
    %c0_373 = arith.constant 0 : index
    %c0_374 = arith.constant 0 : index
    %408 = vector.load %arg4[%c0_372, %c45, %c0_373, %c0_374] : memref<1x48x8x128xf32, #tpu.memory_space<vmem>>, vector<1x1x8x128xf32>
    %409 = vector.shape_cast %408 : vector<1x1x8x128xf32> to vector<8x128xf32>
    %cst_375 = arith.constant 0.000000e+00 : f32
    %410 = vector.broadcast %cst_375 : f32 to vector<8x8x128xf32>
    %411 = arith.select %389, %7, %410 : vector<8x8x128xi1>, vector<8x8x128xf32>
    %cst_376 = arith.constant dense<0.000000e+00> : vector<8x128xf32>
    %412 = vector.multi_reduction <add>, %411, %cst_376 [0] : vector<8x8x128xf32> to vector<8x128xf32>
    %413 = arith.addf %409, %412 : vector<8x128xf32>
    %c0_377 = arith.constant 0 : index
    %c45_378 = arith.constant 45 : index
    %c0_379 = arith.constant 0 : index
    %c0_380 = arith.constant 0 : index
    %414 = vector.load %arg4[%c0_377, %c45_378, %c0_379, %c0_380] : memref<1x48x8x128xf32, #tpu.memory_space<vmem>>, vector<1x1x8x128xf32>
    %415 = vector.shape_cast %414 : vector<1x1x8x128xf32> to vector<8x128xf32>
    %416 = vector.shape_cast %413 : vector<8x128xf32> to vector<1x1x8x128xf32>
    tpu.vector_store %arg4[%c0_377, %c45_378, %c0_379, %c0_380], %416 {strides = array<i32>} : memref<1x48x8x128xf32, #tpu.memory_space<vmem>>, vector<1x1x8x128xf32>,
    %cst_381 = arith.constant 0.933333337 : f32
    %417 = vector.broadcast %cst_381 : f32 to vector<8x8x128xf32>
    %418 = arith.cmpf ogt, %7, %417 : vector<8x8x128xf32>
    %c0_382 = arith.constant 0 : index
    %c14 = arith.constant 14 : index
    %c0_383 = arith.constant 0 : index
    %c0_384 = arith.constant 0 : index
    %419 = vector.load %arg4[%c0_382, %c14, %c0_383, %c0_384] : memref<1x48x8x128xf32, #tpu.memory_space<vmem>>, vector<1x1x8x128xf32>
    %420 = vector.shape_cast %419 : vector<1x1x8x128xf32> to vector<8x128xf32>
    %421 = arith.extui %418 : vector<8x8x128xi1> to vector<8x8x128xi32>
    %422 = arith.sitofp %421 : vector<8x8x128xi32> to vector<8x8x128xf32>
    %cst_385 = arith.constant dense<0.000000e+00> : vector<8x128xf32>
    %423 = vector.multi_reduction <add>, %422, %cst_385 [0] : vector<8x8x128xf32> to vector<8x128xf32>
    %424 = arith.addf %420, %423 : vector<8x128xf32>
    %c0_386 = arith.constant 0 : index
    %c14_387 = arith.constant 14 : index
    %c0_388 = arith.constant 0 : index
    %c0_389 = arith.constant 0 : index
    %425 = vector.load %arg4[%c0_386, %c14_387, %c0_388, %c0_389] : memref<1x48x8x128xf32, #tpu.memory_space<vmem>>, vector<1x1x8x128xf32>
    %426 = vector.shape_cast %425 : vector<1x1x8x128xf32> to vector<8x128xf32>
    %427 = vector.shape_cast %424 : vector<8x128xf32> to vector<1x1x8x128xf32>
    tpu.vector_store %arg4[%c0_386, %c14_387, %c0_388, %c0_389], %427 {strides = array<i32>} : memref<1x48x8x128xf32, #tpu.memory_space<vmem>>, vector<1x1x8x128xf32>,
    %c0_390 = arith.constant 0 : index
    %c30 = arith.constant 30 : index
    %c0_391 = arith.constant 0 : index
    %c0_392 = arith.constant 0 : index
    %428 = vector.load %arg4[%c0_390, %c30, %c0_391, %c0_392] : memref<1x48x8x128xf32, #tpu.memory_space<vmem>>, vector<1x1x8x128xf32>
    %429 = vector.shape_cast %428 : vector<1x1x8x128xf32> to vector<8x128xf32>
    %cst_393 = arith.constant 0.000000e+00 : f32
    %430 = vector.broadcast %cst_393 : f32 to vector<8x8x128xf32>
    %431 = arith.select %418, %10, %430 : vector<8x8x128xi1>, vector<8x8x128xf32>
    %cst_394 = arith.constant dense<0.000000e+00> : vector<8x128xf32>
    %432 = vector.multi_reduction <add>, %431, %cst_394 [0] : vector<8x8x128xf32> to vector<8x128xf32>
    %433 = arith.addf %429, %432 : vector<8x128xf32>
    %c0_395 = arith.constant 0 : index
    %c30_396 = arith.constant 30 : index
    %c0_397 = arith.constant 0 : index
    %c0_398 = arith.constant 0 : index
    %434 = vector.load %arg4[%c0_395, %c30_396, %c0_397, %c0_398] : memref<1x48x8x128xf32, #tpu.memory_space<vmem>>, vector<1x1x8x128xf32>
    %435 = vector.shape_cast %434 : vector<1x1x8x128xf32> to vector<8x128xf32>
    %436 = vector.shape_cast %433 : vector<8x128xf32> to vector<1x1x8x128xf32>
    tpu.vector_store %arg4[%c0_395, %c30_396, %c0_397, %c0_398], %436 {strides = array<i32>} : memref<1x48x8x128xf32, #tpu.memory_space<vmem>>, vector<1x1x8x128xf32>,
    %c0_399 = arith.constant 0 : index
    %c46 = arith.constant 46 : index
    %c0_400 = arith.constant 0 : index
    %c0_401 = arith.constant 0 : index
    %437 = vector.load %arg4[%c0_399, %c46, %c0_400, %c0_401] : memref<1x48x8x128xf32, #tpu.memory_space<vmem>>, vector<1x1x8x128xf32>
    %438 = vector.shape_cast %437 : vector<1x1x8x128xf32> to vector<8x128xf32>
    %cst_402 = arith.constant 0.000000e+00 : f32
    %439 = vector.broadcast %cst_402 : f32 to vector<8x8x128xf32>
    %440 = arith.select %418, %7, %439 : vector<8x8x128xi1>, vector<8x8x128xf32>
    %cst_403 = arith.constant dense<0.000000e+00> : vector<8x128xf32>
    %441 = vector.multi_reduction <add>, %440, %cst_403 [0] : vector<8x8x128xf32> to vector<8x128xf32>
    %442 = arith.addf %438, %441 : vector<8x128xf32>
    %c0_404 = arith.constant 0 : index
    %c46_405 = arith.constant 46 : index
    %c0_406 = arith.constant 0 : index
    %c0_407 = arith.constant 0 : index
    %443 = vector.load %arg4[%c0_404, %c46_405, %c0_406, %c0_407] : memref<1x48x8x128xf32, #tpu.memory_space<vmem>>, vector<1x1x8x128xf32>
    %444 = vector.shape_cast %443 : vector<1x1x8x128xf32> to vector<8x128xf32>
    %445 = vector.shape_cast %442 : vector<8x128xf32> to vector<1x1x8x128xf32>
    tpu.vector_store %arg4[%c0_404, %c46_405, %c0_406, %c0_407], %445 {strides = array<i32>} : memref<1x48x8x128xf32, #tpu.memory_space<vmem>>, vector<1x1x8x128xf32>,
    %cst_408 = arith.constant 1.000000e+00 : f32
    %446 = vector.broadcast %cst_408 : f32 to vector<8x8x128xf32>
    %447 = arith.cmpf ogt, %7, %446 : vector<8x8x128xf32>
    %c0_409 = arith.constant 0 : index
    %c15 = arith.constant 15 : index
    %c0_410 = arith.constant 0 : index
    %c0_411 = arith.constant 0 : index
    %448 = vector.load %arg4[%c0_409, %c15, %c0_410, %c0_411] : memref<1x48x8x128xf32, #tpu.memory_space<vmem>>, vector<1x1x8x128xf32>
    %449 = vector.shape_cast %448 : vector<1x1x8x128xf32> to vector<8x128xf32>
    %450 = arith.extui %447 : vector<8x8x128xi1> to vector<8x8x128xi32>
    %451 = arith.sitofp %450 : vector<8x8x128xi32> to vector<8x8x128xf32>
    %cst_412 = arith.constant dense<0.000000e+00> : vector<8x128xf32>
    %452 = vector.multi_reduction <add>, %451, %cst_412 [0] : vector<8x8x128xf32> to vector<8x128xf32>
    %453 = arith.addf %449, %452 : vector<8x128xf32>
    %c0_413 = arith.constant 0 : index
    %c15_414 = arith.constant 15 : index
    %c0_415 = arith.constant 0 : index
    %c0_416 = arith.constant 0 : index
    %454 = vector.load %arg4[%c0_413, %c15_414, %c0_415, %c0_416] : memref<1x48x8x128xf32, #tpu.memory_space<vmem>>, vector<1x1x8x128xf32>
    %455 = vector.shape_cast %454 : vector<1x1x8x128xf32> to vector<8x128xf32>
    %456 = vector.shape_cast %453 : vector<8x128xf32> to vector<1x1x8x128xf32>
    tpu.vector_store %arg4[%c0_413, %c15_414, %c0_415, %c0_416], %456 {strides = array<i32>} : memref<1x48x8x128xf32, #tpu.memory_space<vmem>>, vector<1x1x8x128xf32>,
    %c0_417 = arith.constant 0 : index
    %c31 = arith.constant 31 : index
    %c0_418 = arith.constant 0 : index
    %c0_419 = arith.constant 0 : index
    %457 = vector.load %arg4[%c0_417, %c31, %c0_418, %c0_419] : memref<1x48x8x128xf32, #tpu.memory_space<vmem>>, vector<1x1x8x128xf32>
    %458 = vector.shape_cast %457 : vector<1x1x8x128xf32> to vector<8x128xf32>
    %cst_420 = arith.constant 0.000000e+00 : f32
    %459 = vector.broadcast %cst_420 : f32 to vector<8x8x128xf32>
    %460 = arith.select %447, %10, %459 : vector<8x8x128xi1>, vector<8x8x128xf32>
    %cst_421 = arith.constant dense<0.000000e+00> : vector<8x128xf32>
    %461 = vector.multi_reduction <add>, %460, %cst_421 [0] : vector<8x8x128xf32> to vector<8x128xf32>
    %462 = arith.addf %458, %461 : vector<8x128xf32>
    %c0_422 = arith.constant 0 : index
    %c31_423 = arith.constant 31 : index
    %c0_424 = arith.constant 0 : index
    %c0_425 = arith.constant 0 : index
    %463 = vector.load %arg4[%c0_422, %c31_423, %c0_424, %c0_425] : memref<1x48x8x128xf32, #tpu.memory_space<vmem>>, vector<1x1x8x128xf32>
    %464 = vector.shape_cast %463 : vector<1x1x8x128xf32> to vector<8x128xf32>
    %465 = vector.shape_cast %462 : vector<8x128xf32> to vector<1x1x8x128xf32>
    tpu.vector_store %arg4[%c0_422, %c31_423, %c0_424, %c0_425], %465 {strides = array<i32>} : memref<1x48x8x128xf32, #tpu.memory_space<vmem>>, vector<1x1x8x128xf32>,
    %c0_426 = arith.constant 0 : index
    %c47 = arith.constant 47 : index
    %c0_427 = arith.constant 0 : index
    %c0_428 = arith.constant 0 : index
    %466 = vector.load %arg4[%c0_426, %c47, %c0_427, %c0_428] : memref<1x48x8x128xf32, #tpu.memory_space<vmem>>, vector<1x1x8x128xf32>
    %467 = vector.shape_cast %466 : vector<1x1x8x128xf32> to vector<8x128xf32>
    %cst_429 = arith.constant 0.000000e+00 : f32
    %468 = vector.broadcast %cst_429 : f32 to vector<8x8x128xf32>
    %469 = arith.select %447, %7, %468 : vector<8x8x128xi1>, vector<8x8x128xf32>
    %cst_430 = arith.constant dense<0.000000e+00> : vector<8x128xf32>
    %470 = vector.multi_reduction <add>, %469, %cst_430 [0] : vector<8x8x128xf32> to vector<8x128xf32>
    %471 = arith.addf %467, %470 : vector<8x128xf32>
    %c0_431 = arith.constant 0 : index
    %c47_432 = arith.constant 47 : index
    %c0_433 = arith.constant 0 : index
    %c0_434 = arith.constant 0 : index
    %472 = vector.load %arg4[%c0_431, %c47_432, %c0_433, %c0_434] : memref<1x48x8x128xf32, #tpu.memory_space<vmem>>, vector<1x1x8x128xf32>
    %473 = vector.shape_cast %472 : vector<1x1x8x128xf32> to vector<8x128xf32>
    %474 = vector.shape_cast %471 : vector<8x128xf32> to vector<1x1x8x128xf32>
    tpu.vector_store %arg4[%c0_431, %c47_432, %c0_433, %c0_434], %474 {strides = array<i32>} : memref<1x48x8x128xf32, #tpu.memory_space<vmem>>, vector<1x1x8x128xf32>,
    %c1_i32 = arith.constant 1 : i32
    return
  }
  func.func @transform_0(%arg0: i32, %arg1: i32) -> (i32, i32) {
    %c1_i32 = arith.constant 1 : i32
    %0 = arith.muli %arg0, %c1_i32 : i32
    %1 = arith.addi %0, %arg1 : i32
    %c0_i32 = arith.constant 0 : i32
    %c0_i32_0 = arith.constant 0 : i32
    return %1, %c0_i32 : i32, i32
  }
  func.func @transform_1(%arg0: i32, %arg1: i32) -> (i32, i32) {
    %c1_i32 = arith.constant 1 : i32
    %0 = arith.muli %arg0, %c1_i32 : i32
    %1 = arith.addi %0, %arg1 : i32
    %c0_i32 = arith.constant 0 : i32
    %c0_i32_0 = arith.constant 0 : i32
    return %1, %c0_i32 : i32, i32
  }
  func.func @transform_2(%arg0: i32, %arg1: i32) -> (i32, i32, i32, i32) {
    %c0_i32 = arith.constant 0 : i32
    %c0_i32_0 = arith.constant 0 : i32
    %c0_i32_1 = arith.constant 0 : i32
    %c0_i32_2 = arith.constant 0 : i32
    return %arg0, %c0_i32, %c0_i32_0, %c0_i32_1 : i32, i32, i32, i32
  }
}

</mosaic_0001>

<llo_original>
// kernel: tpu_custom_call.1
$region0: #{tpu_custom_call.1}
  #allocation0 [shape = 'u32[]', space=smem, size = 0x4, offset = 0x4, fixed_abs, tag = 'smem constant byte address 0x4 - core index']
  #allocation1 [shape = 'u32[144,128]{1,0:T(1,128)}', space=vmem, size = 0x12000, scoped, tag = 'internal scratch']
  %s0 = inlined_call_operand.hbm [shape: f32[128,128], index: 0, kind: input, shape index: {}]
  %s1 = inlined_call_operand.hbm [shape: f32[128,128], index: 1, kind: input, shape index: {}]
  %s2 = inlined_call_operand.hbm [shape: f32[2,48,8,128], index: 2, kind: output, shape index: {}]
  %s3 = sld [smem:[#allocation0]]
  $region53: #{tpu_custom_call.1} parent=0
    _
  %s5 = ssub.s32 1, %s3
  %s6 = scalar_select 0, %s5, %s3
  $region1: #{tpu_custom_call.1} parent=0
    #allocation2 [shape = 'u8[65536]{0}', space=vmem, size = 0x10000, scoped, tag = 'input window, operand 0']
    #allocation3 [shape = 's32[2]{0}', space=sflag, size = 0x8, scoped, tag = 'scoped memory for tpu_custom_call.1']
    #allocation4 [shape = 's32[2]{0}', space=sflag, size = 0x8, scoped, tag = 'scoped memory for tpu_custom_call.1']
    #allocation5 [shape = 'u8[65536]{0}', space=vmem, size = 0x10000, scoped, tag = 'input window, operand 1']
    #allocation6 [shape = 's32[2]{0}', space=sflag, size = 0x8, scoped, tag = 'scoped memory for tpu_custom_call.1']
    #allocation7 [shape = 'u8[393216]{0}', space=vmem, size = 0x60000, scoped, tag = 'output window, operand 0']
    %7 = vsyncpa [#allocation3], 0
    %s8 = scalar_lea.sflag [#allocation3], 1
    %9 = vsyncpa %s8, 0
    %10 = vsyncpa [#allocation6], 0
    %s11 = scalar_lea.sflag [#allocation6], 1
    %12 = vsyncpa %s11, 0
    %13 = vsyncpa [#allocation4], 0
    %s14 = scalar_lea.sflag [#allocation4], 1
    %15 = vsyncpa %s14, 0
    loop: start=0, step=1, limit=4
    $region2: #{tpu_custom_call.1} parent=1 // loop_pre_header
      _
    $region3: #{tpu_custom_call.1} parent=1 // loop_header
      %s17 = sphi 0, %s21
      %p18 = scmp.ge.s32.totalorder %s17, 4
      %s24 = sphi 0, %s36
      %s25 = sphi 0, %s32
      %s26 = sphi 0, %s24
      %s27 = sphi 0, %s25
      %s28 = sphi 0, %s26
      %s29 = sphi 0, %s27
      %s41 = sphi 0, %s43
      %s44 = sphi 0, %s41
      %s45 = sphi 0, %s44
      %s61 = sphi 0, %s45
      %s69 = sphi 0, %s71
      %s72 = sphi 0, %s69
      %s73 = sphi 0, %s72
      %s89 = sphi 0, %s73
      %s95 = sphi 0, %s97
      %s98 = sphi 0, %s95
      %s99 = sphi 0, %s98
      %s115 = sphi 0, %s99
    $region4: #{tpu_custom_call.1} parent=1 // loop_header_branch
      %20 = sbr.rel (%p18) target = $region8
    $region5: #{tpu_custom_call.1} parent=1 // loop_body
      %s22 = ssub.s32 %s17, 1
      %s23 = ssub.s32 %s17, 2
      %s30 = sadd.s32 1, %s25
      %p31 = scmp.ge.s32.totalorder %s30, 1
      %s32 = scalar_select %p31, 0, %s30
      %s33 = sadd.s32 1, %s24
      %s34 = scalar_select %p31, %s33, %s24
      %p35 = scmp.ge.s32.totalorder %s34, 2
      %s36 = scalar_select %p35, 0, %s34
      %s37 = sadd.s32 %s24, %s25
      %s38 = sadd.s32 %s36, %s32
      %s39 = ssub.s32 %s37, %s38
      %p40 = scmp.eq.s32.totalorder %s39, 0
      %s42 = sadd.s32 %s41, 1
      %s43 = scalar_select %p40, %s41, %s42
      %p46 = pneg %p40
      %p47 = scmp.eq.s32.totalorder %s17, 1
      %p48 = por %p46, %p47
      %p49 = scmp.ne.s32.totalorder %s41, %s44
      %p50 = scmp.eq.s32.totalorder %s17, 0
      %p51 = por %p49, %p50
      %p52 = scmp.ne.s32.totalorder %s41, %s44
      %p53 = scmp.eq.s32.totalorder %s22, 1
      %p54 = por %p52, %p53
      %p55 = scmp.ne.s32.totalorder %s44, %s45
      %p56 = scmp.eq.s32.totalorder %s22, 0
      %p57 = por %p55, %p56
      %p58 = scmp.ne.s32.totalorder %s44, %s45
      %p59 = scmp.eq.s32.totalorder %s23, 1
      %p60 = por %p58, %p59
      %p62 = scmp.ne.s32.totalorder %s45, %s61
      %p63 = scmp.eq.s32.totalorder %s23, 0
      %p64 = por %p62, %p63
      %s65 = sadd.s32 %s24, %s25
      %s66 = sadd.s32 %s36, %s32
      %s67 = ssub.s32 %s65, %s66
      %p68 = scmp.eq.s32.totalorder %s67, 0
      %s70 = sadd.s32 %s69, 1
      %s71 = scalar_select %p68, %s69, %s70
      %p74 = pneg %p68
      %p75 = scmp.eq.s32.totalorder %s17, 1
      %p76 = por %p74, %p75
      %p77 = scmp.ne.s32.totalorder %s69, %s72
      %p78 = scmp.eq.s32.totalorder %s17, 0
      %p79 = por %p77, %p78
      %p80 = scmp.ne.s32.totalorder %s69, %s72
      %p81 = scmp.eq.s32.totalorder %s22, 1
      %p82 = por %p80, %p81
      %p83 = scmp.ne.s32.totalorder %s72, %s73
      %p84 = scmp.eq.s32.totalorder %s22, 0
      %p85 = por %p83, %p84
      %p86 = scmp.ne.s32.totalorder %s72, %s73
      %p87 = scmp.eq.s32.totalorder %s23, 1
      %p88 = por %p86, %p87
      %p90 = scmp.ne.s32.totalorder %s73, %s89
      %p91 = scmp.eq.s32.totalorder %s23, 0
      %p92 = por %p90, %p91
      %s93 = ssub.s32 %s24, %s36
      %p94 = scmp.eq.s32.totalorder %s93, 0
      %s96 = sadd.s32 %s95, 1
      %s97 = scalar_select %p94, %s95, %s96
      %p100 = pneg %p94
      %p101 = scmp.eq.s32.totalorder %s17, 1
      %p102 = por %p100, %p101
      %p103 = scmp.ne.s32.totalorder %s95, %s98
      %p104 = scmp.eq.s32.totalorder %s17, 0
      %p105 = por %p103, %p104
      %p106 = scmp.ne.s32.totalorder %s95, %s98
      %p107 = scmp.eq.s32.totalorder %s22, 1
      %p108 = por %p106, %p107
      %p109 = scmp.ne.s32.totalorder %s98, %s99
      %p110 = scmp.eq.s32.totalorder %s22, 0
      %p111 = por %p109, %p110
      %p112 = scmp.ne.s32.totalorder %s98, %s99
      %p113 = scmp.eq.s32.totalorder %s23, 1
      %p114 = por %p112, %p113
      %p116 = scmp.ne.s32.totalorder %s99, %s115
      %p117 = scmp.eq.s32.totalorder %s23, 0
      %p118 = por %p116, %p117
      %p119 = scmp.le.s32.totalorder 1, %s17
      %p120 = scmp.lt.s32.totalorder %s17, 3
      %p121 = pnand %p119, %p120
      %p122 = pneg %p121
      // Predicated region
      $region9: #{tpu_custom_call.1} parent=5 // pred_check
        _
      $region10: #{tpu_custom_call.1} parent=5 // pred_check_branch
        %124 = sbr.rel (%p121) target = $region12
      $region11: #{tpu_custom_call.1} parent=5 // pred_region
        %s125 = ssub.s32 %s17, 1
      $region12: #{tpu_custom_call.1} parent=5 // pred_fallthru
        _
      %p126 = scmp.lt.s32.totalorder %s17, 2
      // Predicated region
      $region13: #{tpu_custom_call.1} parent=5 // pred_check
        %p127 = pneg %p126
      $region14: #{tpu_custom_call.1} parent=5 // pred_check_branch
        %129 = sbr.rel (%p127) target = $region16
      $region15: #{tpu_custom_call.1} parent=5 // pred_region
        // Predicated region
        $region17: #{tpu_custom_call.1} parent=15 // pred_check
          %p130 = pneg %p51
        $region18: #{tpu_custom_call.1} parent=15 // pred_check_branch
          %132 = sbr.rel (%p130) target = $region20
        $region19: #{tpu_custom_call.1} parent=15 // pred_region
          %s133 = sand.u32 %s41, 1
          %s134 = scalar_lea.sflag [#allocation3], %s133
          %s135 = sand.u32 %s41, 1
          %s136 = smul.addr %s135, 64
          %s137 = scalar_lea.vmem [#allocation2], %s136
          %s138 = sadd.s32 %s24, %s25
          %s139 = smul.u32 8, %s138
          %s141 = ssub.s32 1024, 1024
          %142 = vsyncadd %s134, %s141
          %s143 = smul.addr %s139, 128
          %s144 = scalar_lea.hbm %s0, %s143
          %s145 = sshll.u32 %s137, 4
          %s146 = int_to_ptr.vmem [resolvable:$true] %s145
          %151 = dma.hbm_to_vmem [thread:$0]  %s144, 1024, %s146, %s134, 128, 128, 8
        $region20: #{tpu_custom_call.1} parent=15 // pred_fallthru
          _
        // Predicated region
        $region21: #{tpu_custom_call.1} parent=15 // pred_check
          %p152 = pneg %p79
        $region22: #{tpu_custom_call.1} parent=15 // pred_check_branch
          %154 = sbr.rel (%p152) target = $region24
        $region23: #{tpu_custom_call.1} parent=15 // pred_region
          %s155 = sand.u32 %s69, 1
          %s156 = scalar_lea.sflag [#allocation6], %s155
          %s157 = sand.u32 %s69, 1
          %s158 = smul.addr %s157, 64
          %s159 = scalar_lea.vmem [#allocation5], %s158
          %s160 = sadd.s32 %s24, %s25
          %s161 = smul.u32 8, %s160
          %s163 = ssub.s32 1024, 1024
          %164 = vsyncadd %s156, %s163
          %s165 = smul.addr %s161, 128
          %s166 = scalar_lea.hbm %s1, %s165
          %s167 = sshll.u32 %s159, 4
          %s168 = int_to_ptr.vmem [resolvable:$true] %s167
          %173 = dma.hbm_to_vmem [thread:$0]  %s166, 1024, %s168, %s156, 128, 128, 8
        $region24: #{tpu_custom_call.1} parent=15 // pred_fallthru
          _
      $region16: #{tpu_custom_call.1} parent=5 // pred_fallthru
        _
      %p174 = scmp.le.s32.totalorder 1, %s17
      %p175 = scmp.lt.s32.totalorder %s17, 3
      %p176 = pnand %p174, %p175
      %p177 = pneg %p176
      // Predicated region
      $region25: #{tpu_custom_call.1} parent=5 // pred_check
        _
      $region26: #{tpu_custom_call.1} parent=5 // pred_check_branch
        %179 = sbr.rel (%p176) target = $region28
      $region27: #{tpu_custom_call.1} parent=5 // pred_region
        %s180 = ssub.s32 %s17, 1
        %s181 = sand.u32 %s44, 1
        %s182 = scalar_lea.sflag [#allocation3], %s181
        %s183 = sand.u32 %s44, 1
        %s184 = smul.addr %s183, 64
        %s185 = scalar_lea.vmem [#allocation2], %s184
        // Predicated region
        $region29: #{tpu_custom_call.1} parent=27 // pred_check
          %p186 = pneg %p57
        $region30: #{tpu_custom_call.1} parent=27 // pred_check_branch
          %188 = sbr.rel (%p186) target = $region32
        $region31: #{tpu_custom_call.1} parent=27 // pred_region
          %189 = dma.done %s182, 1024
        $region32: #{tpu_custom_call.1} parent=27 // pred_fallthru
          _
        %s190 = sand.u32 %s72, 1
        %s191 = scalar_lea.sflag [#allocation6], %s190
        %s192 = sand.u32 %s72, 1
        %s193 = smul.addr %s192, 64
        %s194 = scalar_lea.vmem [#allocation5], %s193
        // Predicated region
        $region33: #{tpu_custom_call.1} parent=27 // pred_check
          %p195 = pneg %p85
        $region34: #{tpu_custom_call.1} parent=27 // pred_check_branch
          %197 = sbr.rel (%p195) target = $region36
        $region35: #{tpu_custom_call.1} parent=27 // pred_region
          %198 = dma.done %s191, 1024
        $region36: #{tpu_custom_call.1} parent=27 // pred_fallthru
          _
        %s199 = sand.u32 %s44, 1
        %s200 = scalar_lea.sflag [#allocation3], %s199
        %s201 = sand.u32 %s44, 1
        %s202 = smul.addr %s201, 64
        %s203 = scalar_lea.vmem [#allocation2], %s202
        %p204 = pneg %p57
        %p205 = pneg %p54
        %s206 = sand.u32 %s72, 1
        %s207 = scalar_lea.sflag [#allocation6], %s206
        %s208 = sand.u32 %s72, 1
        %s209 = smul.addr %s208, 64
        %s210 = scalar_lea.vmem [#allocation5], %s209
        %p211 = pneg %p85
        %p212 = pneg %p82
        %p213 = pneg %p111
        %p214 = pneg %p108
        %s215 = sand.u32 %s98, 1
        %s216 = scalar_lea.sflag [#allocation4], %s215
        %s217 = sand.u32 %s98, 1
        %s218 = smul.addr %s217, 384
        %s219 = scalar_lea.vmem [#allocation7], %s218
        %s220 = sadd.s32 %s26, %s27
        %s221 = smul.u32 8, %s220
        %s222 = sadd.s32 %s26, %s27
        %s223 = smul.u32 8, %s222
        %p224 = scmp.eq.s32.totalorder %s27, 0
        // Predicated region
        $region37: #{tpu_custom_call.1} parent=27 // pred_check
          %p225 = pneg %p224
        $region38: #{tpu_custom_call.1} parent=27 // pred_check_branch
          %227 = sbr.rel (%p225) target = $region40
        $region39: #{tpu_custom_call.1} parent=27 // pred_region
          %228 = vst [vmem:[%s219] sm:$0xff] 0.0
          %229 = vst [vmem:[%s219 + $0x8] sm:$0xff] 0.0
          %230 = vst [vmem:[%s219 + $0x10] sm:$0xff] 0.0
          %231 = vst [vmem:[%s219 + $0x18] sm:$0xff] 0.0
          %232 = vst [vmem:[%s219 + $0x20] sm:$0xff] 0.0
          %233 = vst [vmem:[%s219 + $0x28] sm:$0xff] 0.0
          %234 = vst [vmem:[%s219 + $0x30] sm:$0xff] 0.0
          %235 = vst [vmem:[%s219 + $0x38] sm:$0xff] 0.0
          %236 = vst [vmem:[%s219 + $0x40] sm:$0xff] 0.0
          %237 = vst [vmem:[%s219 + $0x48] sm:$0xff] 0.0
          %238 = vst [vmem:[%s219 + $0x50] sm:$0xff] 0.0
          %239 = vst [vmem:[%s219 + $0x58] sm:$0xff] 0.0
          %240 = vst [vmem:[%s219 + $0x60] sm:$0xff] 0.0
          %241 = vst [vmem:[%s219 + $0x68] sm:$0xff] 0.0
          %242 = vst [vmem:[%s219 + $0x70] sm:$0xff] 0.0
          %243 = vst [vmem:[%s219 + $0x78] sm:$0xff] 0.0
          %244 = vst [vmem:[%s219 + $0x80] sm:$0xff] 0.0
          %245 = vst [vmem:[%s219 + $0x88] sm:$0xff] 0.0
          %246 = vst [vmem:[%s219 + $0x90] sm:$0xff] 0.0
          %247 = vst [vmem:[%s219 + $0x98] sm:$0xff] 0.0
          %248 = vst [vmem:[%s219 + $0xa0] sm:$0xff] 0.0
          %249 = vst [vmem:[%s219 + $0xa8] sm:$0xff] 0.0
          %250 = vst [vmem:[%s219 + $0xb0] sm:$0xff] 0.0
          %251 = vst [vmem:[%s219 + $0xb8] sm:$0xff] 0.0
          %252 = vst [vmem:[%s219 + $0xc0] sm:$0xff] 0.0
          %253 = vst [vmem:[%s219 + $0xc8] sm:$0xff] 0.0
          %254 = vst [vmem:[%s219 + $0xd0] sm:$0xff] 0.0
          %255 = vst [vmem:[%s219 + $0xd8] sm:$0xff] 0.0
          %256 = vst [vmem:[%s219 + $0xe0] sm:$0xff] 0.0
          %257 = vst [vmem:[%s219 + $0xe8] sm:$0xff] 0.0
          %258 = vst [vmem:[%s219 + $0xf0] sm:$0xff] 0.0
          %259 = vst [vmem:[%s219 + $0xf8] sm:$0xff] 0.0
          %260 = vst [vmem:[%s219 + $0x100] sm:$0xff] 0.0
          %261 = vst [vmem:[%s219 + $0x108] sm:$0xff] 0.0
          %262 = vst [vmem:[%s219 + $0x110] sm:$0xff] 0.0
          %263 = vst [vmem:[%s219 + $0x118] sm:$0xff] 0.0
          %264 = vst [vmem:[%s219 + $0x120] sm:$0xff] 0.0
          %265 = vst [vmem:[%s219 + $0x128] sm:$0xff] 0.0
          %266 = vst [vmem:[%s219 + $0x130] sm:$0xff] 0.0
          %267 = vst [vmem:[%s219 + $0x138] sm:$0xff] 0.0
          %268 = vst [vmem:[%s219 + $0x140] sm:$0xff] 0.0
          %269 = vst [vmem:[%s219 + $0x148] sm:$0xff] 0.0
          %270 = vst [vmem:[%s219 + $0x150] sm:$0xff] 0.0
          %271 = vst [vmem:[%s219 + $0x158] sm:$0xff] 0.0
          %272 = vst [vmem:[%s219 + $0x160] sm:$0xff] 0.0
          %273 = vst [vmem:[%s219 + $0x168] sm:$0xff] 0.0
          %274 = vst [vmem:[%s219 + $0x170] sm:$0xff] 0.0
          %275 = vst [vmem:[%s219 + $0x178] sm:$0xff] 0.0
        $region40: #{tpu_custom_call.1} parent=27 // pred_fallthru
          _
        %v276 = vld [vmem:[%s185] sm:$0xff]
        %v277 = vld [vmem:[%s185 + $0x8] sm:$0xff]
        %v278 = vld [vmem:[%s185 + $0x10] sm:$0xff]
        %v279 = vld [vmem:[%s185 + $0x18] sm:$0xff]
        %v280 = vld [vmem:[%s185 + $0x20] sm:$0xff]
        %v281 = vld [vmem:[%s185 + $0x28] sm:$0xff]
        %v282 = vld [vmem:[%s185 + $0x30] sm:$0xff]
        %v283 = vld [vmem:[%s185 + $0x38] sm:$0xff]
        %v284 = vld [vmem:[%s194] sm:$0xff]
        %v285 = vld [vmem:[%s194 + $0x8] sm:$0xff]
        %v286 = vld [vmem:[%s194 + $0x10] sm:$0xff]
        %v287 = vld [vmem:[%s194 + $0x18] sm:$0xff]
        %v288 = vld [vmem:[%s194 + $0x20] sm:$0xff]
        %v289 = vld [vmem:[%s194 + $0x28] sm:$0xff]
        %v290 = vld [vmem:[%s194 + $0x30] sm:$0xff]
        %v291 = vld [vmem:[%s194 + $0x38] sm:$0xff]
        %vm292 = vcmp.gt.f32.partialorder %v276, 0.0
        %vm293 = vcmp.gt.f32.partialorder %v277, 0.0
        %vm294 = vcmp.gt.f32.partialorder %v278, 0.0
        %vm295 = vcmp.gt.f32.partialorder %v279, 0.0
        %vm296 = vcmp.gt.f32.partialorder %v280, 0.0
        %vm297 = vcmp.gt.f32.partialorder %v281, 0.0
        %vm298 = vcmp.gt.f32.partialorder %v282, 0.0
        %vm299 = vcmp.gt.f32.partialorder %v283, 0.0
        %v300 = vld [vmem:[%s219] sm:$0xff]
        %v301 = vsel %vm292, 1, 0
        %v302 = vsel %vm293, 1, 0
        %v303 = vsel %vm294, 1, 0
        %v304 = vsel %vm295, 1, 0
        %v305 = vsel %vm296, 1, 0
        %v306 = vsel %vm297, 1, 0
        %v307 = vsel %vm298, 1, 0
        %v308 = vsel %vm299, 1, 0
        %v309 = vcvt.s32.f32 %v301
        %v310 = vcvt.s32.f32 %v302
        %v311 = vcvt.s32.f32 %v303
        %v312 = vcvt.s32.f32 %v304
        %v313 = vcvt.s32.f32 %v305
        %v314 = vcvt.s32.f32 %v306
        %v315 = vcvt.s32.f32 %v307
        %v316 = vcvt.s32.f32 %v308
        %v317 = vadd.f32 %v309, %v310
        %v318 = vadd.f32 %v317, %v311
        %v319 = vadd.f32 %v318, %v312
        %v320 = vadd.f32 %v319, %v313
        %v321 = vadd.f32 %v320, %v314
        %v322 = vadd.f32 %v321, %v315
        %v323 = vadd.f32 %v322, %v316
        %v324 = vadd.f32 %v300, %v323
        %325 = vst [vmem:[%s219] sm:$0xff] %v324
        %s326 = scalar_lea.vmem %s219, 128 [#allocation7]
        %v327 = vld [vmem:[%s326] sm:$0xff]
        %v328 = vsel %vm292, %v284, 0.0
        %v329 = vsel %vm293, %v285, 0.0
        %v330 = vsel %vm294, %v286, 0.0
        %v331 = vsel %vm295, %v287, 0.0
        %v332 = vsel %vm296, %v288, 0.0
        %v333 = vsel %vm297, %v289, 0.0
        %v334 = vsel %vm298, %v290, 0.0
        %v335 = vsel %vm299, %v291, 0.0
        %v336 = vadd.f32 %v328, %v329
        %v337 = vadd.f32 %v336, %v330
        %v338 = vadd.f32 %v337, %v331
        %v339 = vadd.f32 %v338, %v332
        %v340 = vadd.f32 %v339, %v333
        %v341 = vadd.f32 %v340, %v334
        %v342 = vadd.f32 %v341, %v335
        %v343 = vadd.f32 %v327, %v342
        %344 = vst [vmem:[%s326] sm:$0xff] %v343
        %s345 = scalar_lea.vmem %s219, 256 [#allocation7]
        %v346 = vld [vmem:[%s345] sm:$0xff]
        %v347 = vsel %vm292, %v276, 0.0
        %v348 = vsel %vm293, %v277, 0.0
        %v349 = vsel %vm294, %v278, 0.0
        %v350 = vsel %vm295, %v279, 0.0
        %v351 = vsel %vm296, %v280, 0.0
        %v352 = vsel %vm297, %v281, 0.0
        %v353 = vsel %vm298, %v282, 0.0
        %v354 = vsel %vm299, %v283, 0.0
        %v355 = vadd.f32 %v347, %v348
        %v356 = vadd.f32 %v355, %v349
        %v357 = vadd.f32 %v356, %v350
        %v358 = vadd.f32 %v357, %v351
        %v359 = vadd.f32 %v358, %v352
        %v360 = vadd.f32 %v359, %v353
        %v361 = vadd.f32 %v360, %v354
        %v362 = vadd.f32 %v346, %v361
        %363 = vst [vmem:[%s345] sm:$0xff] %v362
        %vm364 = vcmp.gt.f32.partialorder %v276, 0.06666667
        %vm365 = vcmp.gt.f32.partialorder %v277, 0.06666667
        %vm366 = vcmp.gt.f32.partialorder %v278, 0.06666667
        %vm367 = vcmp.gt.f32.partialorder %v279, 0.06666667
        %vm368 = vcmp.gt.f32.partialorder %v280, 0.06666667
        %vm369 = vcmp.gt.f32.partialorder %v281, 0.06666667
        %vm370 = vcmp.gt.f32.partialorder %v282, 0.06666667
        %vm371 = vcmp.gt.f32.partialorder %v283, 0.06666667
        %s372 = scalar_lea.vmem %s219, 8 [#allocation7]
        %v373 = vld [vmem:[%s372] sm:$0xff]
        %v374 = vsel %vm364, 1, 0
        %v375 = vsel %vm365, 1, 0
        %v376 = vsel %vm366, 1, 0
        %v377 = vsel %vm367, 1, 0
        %v378 = vsel %vm368, 1, 0
        %v379 = vsel %vm369, 1, 0
        %v380 = vsel %vm370, 1, 0
        %v381 = vsel %vm371, 1, 0
        %v382 = vcvt.s32.f32 %v374
        %v383 = vcvt.s32.f32 %v375
        %v384 = vcvt.s32.f32 %v376
        %v385 = vcvt.s32.f32 %v377
        %v386 = vcvt.s32.f32 %v378
        %v387 = vcvt.s32.f32 %v379
        %v388 = vcvt.s32.f32 %v380
        %v389 = vcvt.s32.f32 %v381
        %v390 = vadd.f32 %v382, %v383
        %v391 = vadd.f32 %v390, %v384
        %v392 = vadd.f32 %v391, %v385
        %v393 = vadd.f32 %v392, %v386
        %v394 = vadd.f32 %v393, %v387
        %v395 = vadd.f32 %v394, %v388
        %v396 = vadd.f32 %v395, %v389
        %v397 = vadd.f32 %v373, %v396
        %398 = vst [vmem:[%s372] sm:$0xff] %v397
        %s399 = scalar_lea.vmem %s219, 136 [#allocation7]
        %v400 = vld [vmem:[%s399] sm:$0xff]
        %v401 = vsel %vm364, %v284, 0.0
        %v402 = vsel %vm365, %v285, 0.0
        %v403 = vsel %vm366, %v286, 0.0
        %v404 = vsel %vm367, %v287, 0.0
        %v405 = vsel %vm368, %v288, 0.0
        %v406 = vsel %vm369, %v289, 0.0
        %v407 = vsel %vm370, %v290, 0.0
        %v408 = vsel %vm371, %v291, 0.0
        %v409 = vadd.f32 %v401, %v402
        %v410 = vadd.f32 %v409, %v403
        %v411 = vadd.f32 %v410, %v404
        %v412 = vadd.f32 %v411, %v405
        %v413 = vadd.f32 %v412, %v406
        %v414 = vadd.f32 %v413, %v407
        %v415 = vadd.f32 %v414, %v408
        %v416 = vadd.f32 %v400, %v415
        %417 = vst [vmem:[%s399] sm:$0xff] %v416
        %s418 = scalar_lea.vmem %s219, 264 [#allocation7]
        %v419 = vld [vmem:[%s418] sm:$0xff]
        %v420 = vsel %vm364, %v276, 0.0
        %v421 = vsel %vm365, %v277, 0.0
        %v422 = vsel %vm366, %v278, 0.0
        %v423 = vsel %vm367, %v279, 0.0
        %v424 = vsel %vm368, %v280, 0.0
        %v425 = vsel %vm369, %v281, 0.0
        %v426 = vsel %vm370, %v282, 0.0
        %v427 = vsel %vm371, %v283, 0.0
        %v428 = vadd.f32 %v420, %v421
        %v429 = vadd.f32 %v428, %v422
        %v430 = vadd.f32 %v429, %v423
        %v431 = vadd.f32 %v430, %v424
        %v432 = vadd.f32 %v431, %v425
        %v433 = vadd.f32 %v432, %v426
        %v434 = vadd.f32 %v433, %v427
        %v435 = vadd.f32 %v419, %v434
        %436 = vst [vmem:[%s418] sm:$0xff] %v435
        %vm437 = vcmp.gt.f32.partialorder %v276, 0.13333334
        %vm438 = vcmp.gt.f32.partialorder %v277, 0.13333334
        %vm439 = vcmp.gt.f32.partialorder %v278, 0.13333334
        %vm440 = vcmp.gt.f32.partialorder %v279, 0.13333334
        %vm441 = vcmp.gt.f32.partialorder %v280, 0.13333334
        %vm442 = vcmp.gt.f32.partialorder %v281, 0.13333334
        %vm443 = vcmp.gt.f32.partialorder %v282, 0.13333334
        %vm444 = vcmp.gt.f32.partialorder %v283, 0.13333334
        %s445 = scalar_lea.vmem %s219, 16 [#allocation7]
        %v446 = vld [vmem:[%s445] sm:$0xff]
        %v447 = vsel %vm437, 1, 0
        %v448 = vsel %vm438, 1, 0
        %v449 = vsel %vm439, 1, 0
        %v450 = vsel %vm440, 1, 0
        %v451 = vsel %vm441, 1, 0
        %v452 = vsel %vm442, 1, 0
        %v453 = vsel %vm443, 1, 0
        %v454 = vsel %vm444, 1, 0
        %v455 = vcvt.s32.f32 %v447
        %v456 = vcvt.s32.f32 %v448
        %v457 = vcvt.s32.f32 %v449
        %v458 = vcvt.s32.f32 %v450
        %v459 = vcvt.s32.f32 %v451
        %v460 = vcvt.s32.f32 %v452
        %v461 = vcvt.s32.f32 %v453
        %v462 = vcvt.s32.f32 %v454
        %v463 = vadd.f32 %v455, %v456
        %v464 = vadd.f32 %v463, %v457
        %v465 = vadd.f32 %v464, %v458
        %v466 = vadd.f32 %v465, %v459
        %v467 = vadd.f32 %v466, %v460
        %v468 = vadd.f32 %v467, %v461
        %v469 = vadd.f32 %v468, %v462
        %v470 = vadd.f32 %v446, %v469
        %471 = vst [vmem:[%s445] sm:$0xff] %v470
        %s472 = scalar_lea.vmem %s219, 144 [#allocation7]
        %v473 = vld [vmem:[%s472] sm:$0xff]
        %v474 = vsel %vm437, %v284, 0.0
        %v475 = vsel %vm438, %v285, 0.0
        %v476 = vsel %vm439, %v286, 0.0
        %v477 = vsel %vm440, %v287, 0.0
        %v478 = vsel %vm441, %v288, 0.0
        %v479 = vsel %vm442, %v289, 0.0
        %v480 = vsel %vm443, %v290, 0.0
        %v481 = vsel %vm444, %v291, 0.0
        %v482 = vadd.f32 %v474, %v475
        %v483 = vadd.f32 %v482, %v476
        %v484 = vadd.f32 %v483, %v477
        %v485 = vadd.f32 %v484, %v478
        %v486 = vadd.f32 %v485, %v479
        %v487 = vadd.f32 %v486, %v480
        %v488 = vadd.f32 %v487, %v481
        %v489 = vadd.f32 %v473, %v488
        %490 = vst [vmem:[%s472] sm:$0xff] %v489
        %s491 = scalar_lea.vmem %s219, 272 [#allocation7]
        %v492 = vld [vmem:[%s491] sm:$0xff]
        %v493 = vsel %vm437, %v276, 0.0
        %v494 = vsel %vm438, %v277, 0.0
        %v495 = vsel %vm439, %v278, 0.0
        %v496 = vsel %vm440, %v279, 0.0
        %v497 = vsel %vm441, %v280, 0.0
        %v498 = vsel %vm442, %v281, 0.0
        %v499 = vsel %vm443, %v282, 0.0
        %v500 = vsel %vm444, %v283, 0.0
        %v501 = vadd.f32 %v493, %v494
        %v502 = vadd.f32 %v501, %v495
        %v503 = vadd.f32 %v502, %v496
        %v504 = vadd.f32 %v503, %v497
        %v505 = vadd.f32 %v504, %v498
        %v506 = vadd.f32 %v505, %v499
        %v507 = vadd.f32 %v506, %v500
        %v508 = vadd.f32 %v492, %v507
        %509 = vst [vmem:[%s491] sm:$0xff] %v508
        %vm510 = vcmp.gt.f32.partialorder %v276, 0.2
        %vm511 = vcmp.gt.f32.partialorder %v277, 0.2
        %vm512 = vcmp.gt.f32.partialorder %v278, 0.2
        %vm513 = vcmp.gt.f32.partialorder %v279, 0.2
        %vm514 = vcmp.gt.f32.partialorder %v280, 0.2
        %vm515 = vcmp.gt.f32.partialorder %v281, 0.2
        %vm516 = vcmp.gt.f32.partialorder %v282, 0.2
        %vm517 = vcmp.gt.f32.partialorder %v283, 0.2
        %s518 = scalar_lea.vmem %s219, 24 [#allocation7]
        %v519 = vld [vmem:[%s518] sm:$0xff]
        %v520 = vsel %vm510, 1, 0
        %v521 = vsel %vm511, 1, 0
        %v522 = vsel %vm512, 1, 0
        %v523 = vsel %vm513, 1, 0
        %v524 = vsel %vm514, 1, 0
        %v525 = vsel %vm515, 1, 0
        %v526 = vsel %vm516, 1, 0
        %v527 = vsel %vm517, 1, 0
        %v528 = vcvt.s32.f32 %v520
        %v529 = vcvt.s32.f32 %v521
        %v530 = vcvt.s32.f32 %v522
        %v531 = vcvt.s32.f32 %v523
        %v532 = vcvt.s32.f32 %v524
        %v533 = vcvt.s32.f32 %v525
        %v534 = vcvt.s32.f32 %v526
        %v535 = vcvt.s32.f32 %v527
        %v536 = vadd.f32 %v528, %v529
        %v537 = vadd.f32 %v536, %v530
        %v538 = vadd.f32 %v537, %v531
        %v539 = vadd.f32 %v538, %v532
        %v540 = vadd.f32 %v539, %v533
        %v541 = vadd.f32 %v540, %v534
        %v542 = vadd.f32 %v541, %v535
        %v543 = vadd.f32 %v519, %v542
        %544 = vst [vmem:[%s518] sm:$0xff] %v543
        %s545 = scalar_lea.vmem %s219, 152 [#allocation7]
        %v546 = vld [vmem:[%s545] sm:$0xff]
        %v547 = vsel %vm510, %v284, 0.0
        %v548 = vsel %vm511, %v285, 0.0
        %v549 = vsel %vm512, %v286, 0.0
        %v550 = vsel %vm513, %v287, 0.0
        %v551 = vsel %vm514, %v288, 0.0
        %v552 = vsel %vm515, %v289, 0.0
        %v553 = vsel %vm516, %v290, 0.0
        %v554 = vsel %vm517, %v291, 0.0
        %v555 = vadd.f32 %v547, %v548
        %v556 = vadd.f32 %v555, %v549
        %v557 = vadd.f32 %v556, %v550
        %v558 = vadd.f32 %v557, %v551
        %v559 = vadd.f32 %v558, %v552
        %v560 = vadd.f32 %v559, %v553
        %v561 = vadd.f32 %v560, %v554
        %v562 = vadd.f32 %v546, %v561
        %563 = vst [vmem:[%s545] sm:$0xff] %v562
        %s564 = scalar_lea.vmem %s219, 280 [#allocation7]
        %v565 = vld [vmem:[%s564] sm:$0xff]
        %v566 = vsel %vm510, %v276, 0.0
        %v567 = vsel %vm511, %v277, 0.0
        %v568 = vsel %vm512, %v278, 0.0
        %v569 = vsel %vm513, %v279, 0.0
        %v570 = vsel %vm514, %v280, 0.0
        %v571 = vsel %vm515, %v281, 0.0
        %v572 = vsel %vm516, %v282, 0.0
        %v573 = vsel %vm517, %v283, 0.0
        %v574 = vadd.f32 %v566, %v567
        %v575 = vadd.f32 %v574, %v568
        %v576 = vadd.f32 %v575, %v569
        %v577 = vadd.f32 %v576, %v570
        %v578 = vadd.f32 %v577, %v571
        %v579 = vadd.f32 %v578, %v572
        %v580 = vadd.f32 %v579, %v573
        %v581 = vadd.f32 %v565, %v580
        %582 = vst [vmem:[%s564] sm:$0xff] %v581
        %vm583 = vcmp.gt.f32.partialorder %v276, 0.26666668
        %vm584 = vcmp.gt.f32.partialorder %v277, 0.26666668
        %vm585 = vcmp.gt.f32.partialorder %v278, 0.26666668
        %vm586 = vcmp.gt.f32.partialorder %v279, 0.26666668
        %vm587 = vcmp.gt.f32.partialorder %v280, 0.26666668
        %vm588 = vcmp.gt.f32.partialorder %v281, 0.26666668
        %vm589 = vcmp.gt.f32.partialorder %v282, 0.26666668
        %vm590 = vcmp.gt.f32.partialorder %v283, 0.26666668
        %s591 = scalar_lea.vmem %s219, 32 [#allocation7]
        %v592 = vld [vmem:[%s591] sm:$0xff]
        %v593 = vsel %vm583, 1, 0
        %v594 = vsel %vm584, 1, 0
        %v595 = vsel %vm585, 1, 0
        %v596 = vsel %vm586, 1, 0
        %v597 = vsel %vm587, 1, 0
        %v598 = vsel %vm588, 1, 0
        %v599 = vsel %vm589, 1, 0
        %v600 = vsel %vm590, 1, 0
        %v601 = vcvt.s32.f32 %v593
        %v602 = vcvt.s32.f32 %v594
        %v603 = vcvt.s32.f32 %v595
        %v604 = vcvt.s32.f32 %v596
        %v605 = vcvt.s32.f32 %v597
        %v606 = vcvt.s32.f32 %v598
        %v607 = vcvt.s32.f32 %v599
        %v608 = vcvt.s32.f32 %v600
        %v609 = vadd.f32 %v601, %v602
        %v610 = vadd.f32 %v609, %v603
        %v611 = vadd.f32 %v610, %v604
        %v612 = vadd.f32 %v611, %v605
        %v613 = vadd.f32 %v612, %v606
        %v614 = vadd.f32 %v613, %v607
        %v615 = vadd.f32 %v614, %v608
        %v616 = vadd.f32 %v592, %v615
        %617 = vst [vmem:[%s591] sm:$0xff] %v616
        %s618 = scalar_lea.vmem %s219, 160 [#allocation7]
        %v619 = vld [vmem:[%s618] sm:$0xff]
        %v620 = vsel %vm583, %v284, 0.0
        %v621 = vsel %vm584, %v285, 0.0
        %v622 = vsel %vm585, %v286, 0.0
        %v623 = vsel %vm586, %v287, 0.0
        %v624 = vsel %vm587, %v288, 0.0
        %v625 = vsel %vm588, %v289, 0.0
        %v626 = vsel %vm589, %v290, 0.0
        %v627 = vsel %vm590, %v291, 0.0
        %v628 = vadd.f32 %v620, %v621
        %v629 = vadd.f32 %v628, %v622
        %v630 = vadd.f32 %v629, %v623
        %v631 = vadd.f32 %v630, %v624
        %v632 = vadd.f32 %v631, %v625
        %v633 = vadd.f32 %v632, %v626
        %v634 = vadd.f32 %v633, %v627
        %v635 = vadd.f32 %v619, %v634
        %636 = vst [vmem:[%s618] sm:$0xff] %v635
        %s637 = scalar_lea.vmem %s219, 288 [#allocation7]
        %v638 = vld [vmem:[%s637] sm:$0xff]
        %v639 = vsel %vm583, %v276, 0.0
        %v640 = vsel %vm584, %v277, 0.0
        %v641 = vsel %vm585, %v278, 0.0
        %v642 = vsel %vm586, %v279, 0.0
        %v643 = vsel %vm587, %v280, 0.0
        %v644 = vsel %vm588, %v281, 0.0
        %v645 = vsel %vm589, %v282, 0.0
        %v646 = vsel %vm590, %v283, 0.0
        %v647 = vadd.f32 %v639, %v640
        %v648 = vadd.f32 %v647, %v641
        %v649 = vadd.f32 %v648, %v642
        %v650 = vadd.f32 %v649, %v643
        %v651 = vadd.f32 %v650, %v644
        %v652 = vadd.f32 %v651, %v645
        %v653 = vadd.f32 %v652, %v646
        %v654 = vadd.f32 %v638, %v653
        %655 = vst [vmem:[%s637] sm:$0xff] %v654
        %vm656 = vcmp.gt.f32.partialorder %v276, 0.33333334
        %vm657 = vcmp.gt.f32.partialorder %v277, 0.33333334
        %vm658 = vcmp.gt.f32.partialorder %v278, 0.33333334
        %vm659 = vcmp.gt.f32.partialorder %v279, 0.33333334
        %vm660 = vcmp.gt.f32.partialorder %v280, 0.33333334
        %vm661 = vcmp.gt.f32.partialorder %v281, 0.33333334
        %vm662 = vcmp.gt.f32.partialorder %v282, 0.33333334
        %vm663 = vcmp.gt.f32.partialorder %v283, 0.33333334
        %s664 = scalar_lea.vmem %s219, 40 [#allocation7]
        %v665 = vld [vmem:[%s664] sm:$0xff]
        %v666 = vsel %vm656, 1, 0
        %v667 = vsel %vm657, 1, 0
        %v668 = vsel %vm658, 1, 0
        %v669 = vsel %vm659, 1, 0
        %v670 = vsel %vm660, 1, 0
        %v671 = vsel %vm661, 1, 0
        %v672 = vsel %vm662, 1, 0
        %v673 = vsel %vm663, 1, 0
        %v674 = vcvt.s32.f32 %v666
        %v675 = vcvt.s32.f32 %v667
        %v676 = vcvt.s32.f32 %v668
        %v677 = vcvt.s32.f32 %v669
        %v678 = vcvt.s32.f32 %v670
        %v679 = vcvt.s32.f32 %v671
        %v680 = vcvt.s32.f32 %v672
        %v681 = vcvt.s32.f32 %v673
        %v682 = vadd.f32 %v674, %v675
        %v683 = vadd.f32 %v682, %v676
        %v684 = vadd.f32 %v683, %v677
        %v685 = vadd.f32 %v684, %v678
        %v686 = vadd.f32 %v685, %v679
        %v687 = vadd.f32 %v686, %v680
        %v688 = vadd.f32 %v687, %v681
        %v689 = vadd.f32 %v665, %v688
        %690 = vst [vmem:[%s664] sm:$0xff] %v689
        %s691 = scalar_lea.vmem %s219, 168 [#allocation7]
        %v692 = vld [vmem:[%s691] sm:$0xff]
        %v693 = vsel %vm656, %v284, 0.0
        %v694 = vsel %vm657, %v285, 0.0
        %v695 = vsel %vm658, %v286, 0.0
        %v696 = vsel %vm659, %v287, 0.0
        %v697 = vsel %vm660, %v288, 0.0
        %v698 = vsel %vm661, %v289, 0.0
        %v699 = vsel %vm662, %v290, 0.0
        %v700 = vsel %vm663, %v291, 0.0
        %v701 = vadd.f32 %v693, %v694
        %v702 = vadd.f32 %v701, %v695
        %v703 = vadd.f32 %v702, %v696
        %v704 = vadd.f32 %v703, %v697
        %v705 = vadd.f32 %v704, %v698
        %v706 = vadd.f32 %v705, %v699
        %v707 = vadd.f32 %v706, %v700
        %v708 = vadd.f32 %v692, %v707
        %709 = vst [vmem:[%s691] sm:$0xff] %v708
        %s710 = scalar_lea.vmem %s219, 296 [#allocation7]
        %v711 = vld [vmem:[%s710] sm:$0xff]
        %v712 = vsel %vm656, %v276, 0.0
        %v713 = vsel %vm657, %v277, 0.0
        %v714 = vsel %vm658, %v278, 0.0
        %v715 = vsel %vm659, %v279, 0.0
        %v716 = vsel %vm660, %v280, 0.0
        %v717 = vsel %vm661, %v281, 0.0
        %v718 = vsel %vm662, %v282, 0.0
        %v719 = vsel %vm663, %v283, 0.0
        %v720 = vadd.f32 %v712, %v713
        %v721 = vadd.f32 %v720, %v714
        %v722 = vadd.f32 %v721, %v715
        %v723 = vadd.f32 %v722, %v716
        %v724 = vadd.f32 %v723, %v717
        %v725 = vadd.f32 %v724, %v718
        %v726 = vadd.f32 %v725, %v719
        %v727 = vadd.f32 %v711, %v726
        %728 = vst [vmem:[%s710] sm:$0xff] %v727
        %vm729 = vcmp.gt.f32.partialorder %v276, 0.4
        %vm730 = vcmp.gt.f32.partialorder %v277, 0.4
        %vm731 = vcmp.gt.f32.partialorder %v278, 0.4
        %vm732 = vcmp.gt.f32.partialorder %v279, 0.4
        %vm733 = vcmp.gt.f32.partialorder %v280, 0.4
        %vm734 = vcmp.gt.f32.partialorder %v281, 0.4
        %vm735 = vcmp.gt.f32.partialorder %v282, 0.4
        %vm736 = vcmp.gt.f32.partialorder %v283, 0.4
        %s737 = scalar_lea.vmem %s219, 48 [#allocation7]
        %v738 = vld [vmem:[%s737] sm:$0xff]
        %v739 = vsel %vm729, 1, 0
        %v740 = vsel %vm730, 1, 0
        %v741 = vsel %vm731, 1, 0
        %v742 = vsel %vm732, 1, 0
        %v743 = vsel %vm733, 1, 0
        %v744 = vsel %vm734, 1, 0
        %v745 = vsel %vm735, 1, 0
        %v746 = vsel %vm736, 1, 0
        %v747 = vcvt.s32.f32 %v739
        %v748 = vcvt.s32.f32 %v740
        %v749 = vcvt.s32.f32 %v741
        %v750 = vcvt.s32.f32 %v742
        %v751 = vcvt.s32.f32 %v743
        %v752 = vcvt.s32.f32 %v744
        %v753 = vcvt.s32.f32 %v745
        %v754 = vcvt.s32.f32 %v746
        %v755 = vadd.f32 %v747, %v748
        %v756 = vadd.f32 %v755, %v749
        %v757 = vadd.f32 %v756, %v750
        %v758 = vadd.f32 %v757, %v751
        %v759 = vadd.f32 %v758, %v752
        %v760 = vadd.f32 %v759, %v753
        %v761 = vadd.f32 %v760, %v754
        %v762 = vadd.f32 %v738, %v761
        %763 = vst [vmem:[%s737] sm:$0xff] %v762
        %s764 = scalar_lea.vmem %s219, 176 [#allocation7]
        %v765 = vld [vmem:[%s764] sm:$0xff]
        %v766 = vsel %vm729, %v284, 0.0
        %v767 = vsel %vm730, %v285, 0.0
        %v768 = vsel %vm731, %v286, 0.0
        %v769 = vsel %vm732, %v287, 0.0
        %v770 = vsel %vm733, %v288, 0.0
        %v771 = vsel %vm734, %v289, 0.0
        %v772 = vsel %vm735, %v290, 0.0
        %v773 = vsel %vm736, %v291, 0.0
        %v774 = vadd.f32 %v766, %v767
        %v775 = vadd.f32 %v774, %v768
        %v776 = vadd.f32 %v775, %v769
        %v777 = vadd.f32 %v776, %v770
        %v778 = vadd.f32 %v777, %v771
        %v779 = vadd.f32 %v778, %v772
        %v780 = vadd.f32 %v779, %v773
        %v781 = vadd.f32 %v765, %v780
        %782 = vst [vmem:[%s764] sm:$0xff] %v781
        %s783 = scalar_lea.vmem %s219, 304 [#allocation7]
        %v784 = vld [vmem:[%s783] sm:$0xff]
        %v785 = vsel %vm729, %v276, 0.0
        %v786 = vsel %vm730, %v277, 0.0
        %v787 = vsel %vm731, %v278, 0.0
        %v788 = vsel %vm732, %v279, 0.0
        %v789 = vsel %vm733, %v280, 0.0
        %v790 = vsel %vm734, %v281, 0.0
        %v791 = vsel %vm735, %v282, 0.0
        %v792 = vsel %vm736, %v283, 0.0
        %v793 = vadd.f32 %v785, %v786
        %v794 = vadd.f32 %v793, %v787
        %v795 = vadd.f32 %v794, %v788
        %v796 = vadd.f32 %v795, %v789
        %v797 = vadd.f32 %v796, %v790
        %v798 = vadd.f32 %v797, %v791
        %v799 = vadd.f32 %v798, %v792
        %v800 = vadd.f32 %v784, %v799
        %801 = vst [vmem:[%s783] sm:$0xff] %v800
        %vm802 = vcmp.gt.f32.partialorder %v276, 0.46666667
        %vm803 = vcmp.gt.f32.partialorder %v277, 0.46666667
        %vm804 = vcmp.gt.f32.partialorder %v278, 0.46666667
        %vm805 = vcmp.gt.f32.partialorder %v279, 0.46666667
        %vm806 = vcmp.gt.f32.partialorder %v280, 0.46666667
        %vm807 = vcmp.gt.f32.partialorder %v281, 0.46666667
        %vm808 = vcmp.gt.f32.partialorder %v282, 0.46666667
        %vm809 = vcmp.gt.f32.partialorder %v283, 0.46666667
        %s810 = scalar_lea.vmem %s219, 56 [#allocation7]
        %v811 = vld [vmem:[%s810] sm:$0xff]
        %v812 = vsel %vm802, 1, 0
        %v813 = vsel %vm803, 1, 0
        %v814 = vsel %vm804, 1, 0
        %v815 = vsel %vm805, 1, 0
        %v816 = vsel %vm806, 1, 0
        %v817 = vsel %vm807, 1, 0
        %v818 = vsel %vm808, 1, 0
        %v819 = vsel %vm809, 1, 0
        %v820 = vcvt.s32.f32 %v812
        %v821 = vcvt.s32.f32 %v813
        %v822 = vcvt.s32.f32 %v814
        %v823 = vcvt.s32.f32 %v815
        %v824 = vcvt.s32.f32 %v816
        %v825 = vcvt.s32.f32 %v817
        %v826 = vcvt.s32.f32 %v818
        %v827 = vcvt.s32.f32 %v819
        %v828 = vadd.f32 %v820, %v821
        %v829 = vadd.f32 %v828, %v822
        %v830 = vadd.f32 %v829, %v823
        %v831 = vadd.f32 %v830, %v824
        %v832 = vadd.f32 %v831, %v825
        %v833 = vadd.f32 %v832, %v826
        %v834 = vadd.f32 %v833, %v827
        %v835 = vadd.f32 %v811, %v834
        %836 = vst [vmem:[%s810] sm:$0xff] %v835
        %s837 = scalar_lea.vmem %s219, 184 [#allocation7]
        %v838 = vld [vmem:[%s837] sm:$0xff]
        %v839 = vsel %vm802, %v284, 0.0
        %v840 = vsel %vm803, %v285, 0.0
        %v841 = vsel %vm804, %v286, 0.0
        %v842 = vsel %vm805, %v287, 0.0
        %v843 = vsel %vm806, %v288, 0.0
        %v844 = vsel %vm807, %v289, 0.0
        %v845 = vsel %vm808, %v290, 0.0
        %v846 = vsel %vm809, %v291, 0.0
        %v847 = vadd.f32 %v839, %v840
        %v848 = vadd.f32 %v847, %v841
        %v849 = vadd.f32 %v848, %v842
        %v850 = vadd.f32 %v849, %v843
        %v851 = vadd.f32 %v850, %v844
        %v852 = vadd.f32 %v851, %v845
        %v853 = vadd.f32 %v852, %v846
        %v854 = vadd.f32 %v838, %v853
        %855 = vst [vmem:[%s837] sm:$0xff] %v854
        %s856 = scalar_lea.vmem %s219, 312 [#allocation7]
        %v857 = vld [vmem:[%s856] sm:$0xff]
        %v858 = vsel %vm802, %v276, 0.0
        %v859 = vsel %vm803, %v277, 0.0
        %v860 = vsel %vm804, %v278, 0.0
        %v861 = vsel %vm805, %v279, 0.0
        %v862 = vsel %vm806, %v280, 0.0
        %v863 = vsel %vm807, %v281, 0.0
        %v864 = vsel %vm808, %v282, 0.0
        %v865 = vsel %vm809, %v283, 0.0
        %v866 = vadd.f32 %v858, %v859
        %v867 = vadd.f32 %v866, %v860
        %v868 = vadd.f32 %v867, %v861
        %v869 = vadd.f32 %v868, %v862
        %v870 = vadd.f32 %v869, %v863
        %v871 = vadd.f32 %v870, %v864
        %v872 = vadd.f32 %v871, %v865
        %v873 = vadd.f32 %v857, %v872
        %874 = vst [vmem:[%s856] sm:$0xff] %v873
        %vm875 = vcmp.gt.f32.partialorder %v276, 0.53333336
        %vm876 = vcmp.gt.f32.partialorder %v277, 0.53333336
        %vm877 = vcmp.gt.f32.partialorder %v278, 0.53333336
        %vm878 = vcmp.gt.f32.partialorder %v279, 0.53333336
        %vm879 = vcmp.gt.f32.partialorder %v280, 0.53333336
        %vm880 = vcmp.gt.f32.partialorder %v281, 0.53333336
        %vm881 = vcmp.gt.f32.partialorder %v282, 0.53333336
        %vm882 = vcmp.gt.f32.partialorder %v283, 0.53333336
        %s883 = scalar_lea.vmem %s219, 64 [#allocation7]
        %v884 = vld [vmem:[%s883] sm:$0xff]
        %v885 = vsel %vm875, 1, 0
        %v886 = vsel %vm876, 1, 0
        %v887 = vsel %vm877, 1, 0
        %v888 = vsel %vm878, 1, 0
        %v889 = vsel %vm879, 1, 0
        %v890 = vsel %vm880, 1, 0
        %v891 = vsel %vm881, 1, 0
        %v892 = vsel %vm882, 1, 0
        %v893 = vcvt.s32.f32 %v885
        %v894 = vcvt.s32.f32 %v886
        %v895 = vcvt.s32.f32 %v887
        %v896 = vcvt.s32.f32 %v888
        %v897 = vcvt.s32.f32 %v889
        %v898 = vcvt.s32.f32 %v890
        %v899 = vcvt.s32.f32 %v891
        %v900 = vcvt.s32.f32 %v892
        %v901 = vadd.f32 %v893, %v894
        %v902 = vadd.f32 %v901, %v895
        %v903 = vadd.f32 %v902, %v896
        %v904 = vadd.f32 %v903, %v897
        %v905 = vadd.f32 %v904, %v898
        %v906 = vadd.f32 %v905, %v899
        %v907 = vadd.f32 %v906, %v900
        %v908 = vadd.f32 %v884, %v907
        %909 = vst [vmem:[%s883] sm:$0xff] %v908
        %s910 = scalar_lea.vmem %s219, 192 [#allocation7]
        %v911 = vld [vmem:[%s910] sm:$0xff]
        %v912 = vsel %vm875, %v284, 0.0
        %v913 = vsel %vm876, %v285, 0.0
        %v914 = vsel %vm877, %v286, 0.0
        %v915 = vsel %vm878, %v287, 0.0
        %v916 = vsel %vm879, %v288, 0.0
        %v917 = vsel %vm880, %v289, 0.0
        %v918 = vsel %vm881, %v290, 0.0
        %v919 = vsel %vm882, %v291, 0.0
        %v920 = vadd.f32 %v912, %v913
        %v921 = vadd.f32 %v920, %v914
        %v922 = vadd.f32 %v921, %v915
        %v923 = vadd.f32 %v922, %v916
        %v924 = vadd.f32 %v923, %v917
        %v925 = vadd.f32 %v924, %v918
        %v926 = vadd.f32 %v925, %v919
        %v927 = vadd.f32 %v911, %v926
        %928 = vst [vmem:[%s910] sm:$0xff] %v927
        %s929 = scalar_lea.vmem %s219, 320 [#allocation7]
        %v930 = vld [vmem:[%s929] sm:$0xff]
        %v931 = vsel %vm875, %v276, 0.0
        %v932 = vsel %vm876, %v277, 0.0
        %v933 = vsel %vm877, %v278, 0.0
        %v934 = vsel %vm878, %v279, 0.0
        %v935 = vsel %vm879, %v280, 0.0
        %v936 = vsel %vm880, %v281, 0.0
        %v937 = vsel %vm881, %v282, 0.0
        %v938 = vsel %vm882, %v283, 0.0
        %v939 = vadd.f32 %v931, %v932
        %v940 = vadd.f32 %v939, %v933
        %v941 = vadd.f32 %v940, %v934
        %v942 = vadd.f32 %v941, %v935
        %v943 = vadd.f32 %v942, %v936
        %v944 = vadd.f32 %v943, %v937
        %v945 = vadd.f32 %v944, %v938
        %v946 = vadd.f32 %v930, %v945
        %947 = vst [vmem:[%s929] sm:$0xff] %v946
        %vm948 = vcmp.gt.f32.partialorder %v276, 0.6
        %vm949 = vcmp.gt.f32.partialorder %v277, 0.6
        %vm950 = vcmp.gt.f32.partialorder %v278, 0.6
        %vm951 = vcmp.gt.f32.partialorder %v279, 0.6
        %vm952 = vcmp.gt.f32.partialorder %v280, 0.6
        %vm953 = vcmp.gt.f32.partialorder %v281, 0.6
        %vm954 = vcmp.gt.f32.partialorder %v282, 0.6
        %vm955 = vcmp.gt.f32.partialorder %v283, 0.6
        %s956 = scalar_lea.vmem %s219, 72 [#allocation7]
        %v957 = vld [vmem:[%s956] sm:$0xff]
        %v958 = vsel %vm948, 1, 0
        %v959 = vsel %vm949, 1, 0
        %v960 = vsel %vm950, 1, 0
        %v961 = vsel %vm951, 1, 0
        %v962 = vsel %vm952, 1, 0
        %v963 = vsel %vm953, 1, 0
        %v964 = vsel %vm954, 1, 0
        %v965 = vsel %vm955, 1, 0
        %v966 = vcvt.s32.f32 %v958
        %v967 = vcvt.s32.f32 %v959
        %v968 = vcvt.s32.f32 %v960
        %v969 = vcvt.s32.f32 %v961
        %v970 = vcvt.s32.f32 %v962
        %v971 = vcvt.s32.f32 %v963
        %v972 = vcvt.s32.f32 %v964
        %v973 = vcvt.s32.f32 %v965
        %v974 = vadd.f32 %v966, %v967
        %v975 = vadd.f32 %v974, %v968
        %v976 = vadd.f32 %v975, %v969
        %v977 = vadd.f32 %v976, %v970
        %v978 = vadd.f32 %v977, %v971
        %v979 = vadd.f32 %v978, %v972
        %v980 = vadd.f32 %v979, %v973
        %v981 = vadd.f32 %v957, %v980
        %982 = vst [vmem:[%s956] sm:$0xff] %v981
        %s983 = scalar_lea.vmem %s219, 200 [#allocation7]
        %v984 = vld [vmem:[%s983] sm:$0xff]
        %v985 = vsel %vm948, %v284, 0.0
        %v986 = vsel %vm949, %v285, 0.0
        %v987 = vsel %vm950, %v286, 0.0
        %v988 = vsel %vm951, %v287, 0.0
        %v989 = vsel %vm952, %v288, 0.0
        %v990 = vsel %vm953, %v289, 0.0
        %v991 = vsel %vm954, %v290, 0.0
        %v992 = vsel %vm955, %v291, 0.0
        %v993 = vadd.f32 %v985, %v986
        %v994 = vadd.f32 %v993, %v987
        %v995 = vadd.f32 %v994, %v988
        %v996 = vadd.f32 %v995, %v989
        %v997 = vadd.f32 %v996, %v990
        %v998 = vadd.f32 %v997, %v991
        %v999 = vadd.f32 %v998, %v992
        %v1000 = vadd.f32 %v984, %v999
        %1001 = vst [vmem:[%s983] sm:$0xff] %v1000
        %s1002 = scalar_lea.vmem %s219, 328 [#allocation7]
        %v1003 = vld [vmem:[%s1002] sm:$0xff]
        %v1004 = vsel %vm948, %v276, 0.0
        %v1005 = vsel %vm949, %v277, 0.0
        %v1006 = vsel %vm950, %v278, 0.0
        %v1007 = vsel %vm951, %v279, 0.0
        %v1008 = vsel %vm952, %v280, 0.0
        %v1009 = vsel %vm953, %v281, 0.0
        %v1010 = vsel %vm954, %v282, 0.0
        %v1011 = vsel %vm955, %v283, 0.0
        %v1012 = vadd.f32 %v1004, %v1005
        %v1013 = vadd.f32 %v1012, %v1006
        %v1014 = vadd.f32 %v1013, %v1007
        %v1015 = vadd.f32 %v1014, %v1008
        %v1016 = vadd.f32 %v1015, %v1009
        %v1017 = vadd.f32 %v1016, %v1010
        %v1018 = vadd.f32 %v1017, %v1011
        %v1019 = vadd.f32 %v1003, %v1018
        %1020 = vst [vmem:[%s1002] sm:$0xff] %v1019
        %vm1021 = vcmp.gt.f32.partialorder %v276, 0.6666667
        %vm1022 = vcmp.gt.f32.partialorder %v277, 0.6666667
        %vm1023 = vcmp.gt.f32.partialorder %v278, 0.6666667
        %vm1024 = vcmp.gt.f32.partialorder %v279, 0.6666667
        %vm1025 = vcmp.gt.f32.partialorder %v280, 0.6666667
        %vm1026 = vcmp.gt.f32.partialorder %v281, 0.6666667
        %vm1027 = vcmp.gt.f32.partialorder %v282, 0.6666667
        %vm1028 = vcmp.gt.f32.partialorder %v283, 0.6666667
        %s1029 = scalar_lea.vmem %s219, 80 [#allocation7]
        %v1030 = vld [vmem:[%s1029] sm:$0xff]
        %v1031 = vsel %vm1021, 1, 0
        %v1032 = vsel %vm1022, 1, 0
        %v1033 = vsel %vm1023, 1, 0
        %v1034 = vsel %vm1024, 1, 0
        %v1035 = vsel %vm1025, 1, 0
        %v1036 = vsel %vm1026, 1, 0
        %v1037 = vsel %vm1027, 1, 0
        %v1038 = vsel %vm1028, 1, 0
        %v1039 = vcvt.s32.f32 %v1031
        %v1040 = vcvt.s32.f32 %v1032
        %v1041 = vcvt.s32.f32 %v1033
        %v1042 = vcvt.s32.f32 %v1034
        %v1043 = vcvt.s32.f32 %v1035
        %v1044 = vcvt.s32.f32 %v1036
        %v1045 = vcvt.s32.f32 %v1037
        %v1046 = vcvt.s32.f32 %v1038
        %v1047 = vadd.f32 %v1039, %v1040
        %v1048 = vadd.f32 %v1047, %v1041
        %v1049 = vadd.f32 %v1048, %v1042
        %v1050 = vadd.f32 %v1049, %v1043
        %v1051 = vadd.f32 %v1050, %v1044
        %v1052 = vadd.f32 %v1051, %v1045
        %v1053 = vadd.f32 %v1052, %v1046
        %v1054 = vadd.f32 %v1030, %v1053
        %1055 = vst [vmem:[%s1029] sm:$0xff] %v1054
        %s1056 = scalar_lea.vmem %s219, 208 [#allocation7]
        %v1057 = vld [vmem:[%s1056] sm:$0xff]
        %v1058 = vsel %vm1021, %v284, 0.0
        %v1059 = vsel %vm1022, %v285, 0.0
        %v1060 = vsel %vm1023, %v286, 0.0
        %v1061 = vsel %vm1024, %v287, 0.0
        %v1062 = vsel %vm1025, %v288, 0.0
        %v1063 = vsel %vm1026, %v289, 0.0
        %v1064 = vsel %vm1027, %v290, 0.0
        %v1065 = vsel %vm1028, %v291, 0.0
        %v1066 = vadd.f32 %v1058, %v1059
        %v1067 = vadd.f32 %v1066, %v1060
        %v1068 = vadd.f32 %v1067, %v1061
        %v1069 = vadd.f32 %v1068, %v1062
        %v1070 = vadd.f32 %v1069, %v1063
        %v1071 = vadd.f32 %v1070, %v1064
        %v1072 = vadd.f32 %v1071, %v1065
        %v1073 = vadd.f32 %v1057, %v1072
        %1074 = vst [vmem:[%s1056] sm:$0xff] %v1073
        %s1075 = scalar_lea.vmem %s219, 336 [#allocation7]
        %v1076 = vld [vmem:[%s1075] sm:$0xff]
        %v1077 = vsel %vm1021, %v276, 0.0
        %v1078 = vsel %vm1022, %v277, 0.0
        %v1079 = vsel %vm1023, %v278, 0.0
        %v1080 = vsel %vm1024, %v279, 0.0
        %v1081 = vsel %vm1025, %v280, 0.0
        %v1082 = vsel %vm1026, %v281, 0.0
        %v1083 = vsel %vm1027, %v282, 0.0
        %v1084 = vsel %vm1028, %v283, 0.0
        %v1085 = vadd.f32 %v1077, %v1078
        %v1086 = vadd.f32 %v1085, %v1079
        %v1087 = vadd.f32 %v1086, %v1080
        %v1088 = vadd.f32 %v1087, %v1081
        %v1089 = vadd.f32 %v1088, %v1082
        %v1090 = vadd.f32 %v1089, %v1083
        %v1091 = vadd.f32 %v1090, %v1084
        %v1092 = vadd.f32 %v1076, %v1091
        %1093 = vst [vmem:[%s1075] sm:$0xff] %v1092
        %vm1094 = vcmp.gt.f32.partialorder %v276, 0.73333335
        %vm1095 = vcmp.gt.f32.partialorder %v277, 0.73333335
        %vm1096 = vcmp.gt.f32.partialorder %v278, 0.73333335
        %vm1097 = vcmp.gt.f32.partialorder %v279, 0.73333335
        %vm1098 = vcmp.gt.f32.partialorder %v280, 0.73333335
        %vm1099 = vcmp.gt.f32.partialorder %v281, 0.73333335
        %vm1100 = vcmp.gt.f32.partialorder %v282, 0.73333335
        %vm1101 = vcmp.gt.f32.partialorder %v283, 0.73333335
        %s1102 = scalar_lea.vmem %s219, 88 [#allocation7]
        %v1103 = vld [vmem:[%s1102] sm:$0xff]
        %v1104 = vsel %vm1094, 1, 0
        %v1105 = vsel %vm1095, 1, 0
        %v1106 = vsel %vm1096, 1, 0
        %v1107 = vsel %vm1097, 1, 0
        %v1108 = vsel %vm1098, 1, 0
        %v1109 = vsel %vm1099, 1, 0
        %v1110 = vsel %vm1100, 1, 0
        %v1111 = vsel %vm1101, 1, 0
        %v1112 = vcvt.s32.f32 %v1104
        %v1113 = vcvt.s32.f32 %v1105
        %v1114 = vcvt.s32.f32 %v1106
        %v1115 = vcvt.s32.f32 %v1107
        %v1116 = vcvt.s32.f32 %v1108
        %v1117 = vcvt.s32.f32 %v1109
        %v1118 = vcvt.s32.f32 %v1110
        %v1119 = vcvt.s32.f32 %v1111
        %v1120 = vadd.f32 %v1112, %v1113
        %v1121 = vadd.f32 %v1120, %v1114
        %v1122 = vadd.f32 %v1121, %v1115
        %v1123 = vadd.f32 %v1122, %v1116
        %v1124 = vadd.f32 %v1123, %v1117
        %v1125 = vadd.f32 %v1124, %v1118
        %v1126 = vadd.f32 %v1125, %v1119
        %v1127 = vadd.f32 %v1103, %v1126
        %1128 = vst [vmem:[%s1102] sm:$0xff] %v1127
        %s1129 = scalar_lea.vmem %s219, 216 [#allocation7]
        %v1130 = vld [vmem:[%s1129] sm:$0xff]
        %v1131 = vsel %vm1094, %v284, 0.0
        %v1132 = vsel %vm1095, %v285, 0.0
        %v1133 = vsel %vm1096, %v286, 0.0
        %v1134 = vsel %vm1097, %v287, 0.0
        %v1135 = vsel %vm1098, %v288, 0.0
        %v1136 = vsel %vm1099, %v289, 0.0
        %v1137 = vsel %vm1100, %v290, 0.0
        %v1138 = vsel %vm1101, %v291, 0.0
        %v1139 = vadd.f32 %v1131, %v1132
        %v1140 = vadd.f32 %v1139, %v1133
        %v1141 = vadd.f32 %v1140, %v1134
        %v1142 = vadd.f32 %v1141, %v1135
        %v1143 = vadd.f32 %v1142, %v1136
        %v1144 = vadd.f32 %v1143, %v1137
        %v1145 = vadd.f32 %v1144, %v1138
        %v1146 = vadd.f32 %v1130, %v1145
        %1147 = vst [vmem:[%s1129] sm:$0xff] %v1146
        %s1148 = scalar_lea.vmem %s219, 344 [#allocation7]
        %v1149 = vld [vmem:[%s1148] sm:$0xff]
        %v1150 = vsel %vm1094, %v276, 0.0
        %v1151 = vsel %vm1095, %v277, 0.0
        %v1152 = vsel %vm1096, %v278, 0.0
        %v1153 = vsel %vm1097, %v279, 0.0
        %v1154 = vsel %vm1098, %v280, 0.0
        %v1155 = vsel %vm1099, %v281, 0.0
        %v1156 = vsel %vm1100, %v282, 0.0
        %v1157 = vsel %vm1101, %v283, 0.0
        %v1158 = vadd.f32 %v1150, %v1151
        %v1159 = vadd.f32 %v1158, %v1152
        %v1160 = vadd.f32 %v1159, %v1153
        %v1161 = vadd.f32 %v1160, %v1154
        %v1162 = vadd.f32 %v1161, %v1155
        %v1163 = vadd.f32 %v1162, %v1156
        %v1164 = vadd.f32 %v1163, %v1157
        %v1165 = vadd.f32 %v1149, %v1164
        %1166 = vst [vmem:[%s1148] sm:$0xff] %v1165
        %vm1167 = vcmp.gt.f32.partialorder %v276, 0.8
        %vm1168 = vcmp.gt.f32.partialorder %v277, 0.8
        %vm1169 = vcmp.gt.f32.partialorder %v278, 0.8
        %vm1170 = vcmp.gt.f32.partialorder %v279, 0.8
        %vm1171 = vcmp.gt.f32.partialorder %v280, 0.8
        %vm1172 = vcmp.gt.f32.partialorder %v281, 0.8
        %vm1173 = vcmp.gt.f32.partialorder %v282, 0.8
        %vm1174 = vcmp.gt.f32.partialorder %v283, 0.8
        %s1175 = scalar_lea.vmem %s219, 96 [#allocation7]
        %v1176 = vld [vmem:[%s1175] sm:$0xff]
        %v1177 = vsel %vm1167, 1, 0
        %v1178 = vsel %vm1168, 1, 0
        %v1179 = vsel %vm1169, 1, 0
        %v1180 = vsel %vm1170, 1, 0
        %v1181 = vsel %vm1171, 1, 0
        %v1182 = vsel %vm1172, 1, 0
        %v1183 = vsel %vm1173, 1, 0
        %v1184 = vsel %vm1174, 1, 0
        %v1185 = vcvt.s32.f32 %v1177
        %v1186 = vcvt.s32.f32 %v1178
        %v1187 = vcvt.s32.f32 %v1179
        %v1188 = vcvt.s32.f32 %v1180
        %v1189 = vcvt.s32.f32 %v1181
        %v1190 = vcvt.s32.f32 %v1182
        %v1191 = vcvt.s32.f32 %v1183
        %v1192 = vcvt.s32.f32 %v1184
        %v1193 = vadd.f32 %v1185, %v1186
        %v1194 = vadd.f32 %v1193, %v1187
        %v1195 = vadd.f32 %v1194, %v1188
        %v1196 = vadd.f32 %v1195, %v1189
        %v1197 = vadd.f32 %v1196, %v1190
        %v1198 = vadd.f32 %v1197, %v1191
        %v1199 = vadd.f32 %v1198, %v1192
        %v1200 = vadd.f32 %v1176, %v1199
        %1201 = vst [vmem:[%s1175] sm:$0xff] %v1200
        %s1202 = scalar_lea.vmem %s219, 224 [#allocation7]
        %v1203 = vld [vmem:[%s1202] sm:$0xff]
        %v1204 = vsel %vm1167, %v284, 0.0
        %v1205 = vsel %vm1168, %v285, 0.0
        %v1206 = vsel %vm1169, %v286, 0.0
        %v1207 = vsel %vm1170, %v287, 0.0
        %v1208 = vsel %vm1171, %v288, 0.0
        %v1209 = vsel %vm1172, %v289, 0.0
        %v1210 = vsel %vm1173, %v290, 0.0
        %v1211 = vsel %vm1174, %v291, 0.0
        %v1212 = vadd.f32 %v1204, %v1205
        %v1213 = vadd.f32 %v1212, %v1206
        %v1214 = vadd.f32 %v1213, %v1207
        %v1215 = vadd.f32 %v1214, %v1208
        %v1216 = vadd.f32 %v1215, %v1209
        %v1217 = vadd.f32 %v1216, %v1210
        %v1218 = vadd.f32 %v1217, %v1211
        %v1219 = vadd.f32 %v1203, %v1218
        %1220 = vst [vmem:[%s1202] sm:$0xff] %v1219
        %s1221 = scalar_lea.vmem %s219, 352 [#allocation7]
        %v1222 = vld [vmem:[%s1221] sm:$0xff]
        %v1223 = vsel %vm1167, %v276, 0.0
        %v1224 = vsel %vm1168, %v277, 0.0
        %v1225 = vsel %vm1169, %v278, 0.0
        %v1226 = vsel %vm1170, %v279, 0.0
        %v1227 = vsel %vm1171, %v280, 0.0
        %v1228 = vsel %vm1172, %v281, 0.0
        %v1229 = vsel %vm1173, %v282, 0.0
        %v1230 = vsel %vm1174, %v283, 0.0
        %v1231 = vadd.f32 %v1223, %v1224
        %v1232 = vadd.f32 %v1231, %v1225
        %v1233 = vadd.f32 %v1232, %v1226
        %v1234 = vadd.f32 %v1233, %v1227
        %v1235 = vadd.f32 %v1234, %v1228
        %v1236 = vadd.f32 %v1235, %v1229
        %v1237 = vadd.f32 %v1236, %v1230
        %v1238 = vadd.f32 %v1222, %v1237
        %1239 = vst [vmem:[%s1221] sm:$0xff] %v1238
        %vm1240 = vcmp.gt.f32.partialorder %v276, 0.8666667
        %vm1241 = vcmp.gt.f32.partialorder %v277, 0.8666667
        %vm1242 = vcmp.gt.f32.partialorder %v278, 0.8666667
        %vm1243 = vcmp.gt.f32.partialorder %v279, 0.8666667
        %vm1244 = vcmp.gt.f32.partialorder %v280, 0.8666667
        %vm1245 = vcmp.gt.f32.partialorder %v281, 0.8666667
        %vm1246 = vcmp.gt.f32.partialorder %v282, 0.8666667
        %vm1247 = vcmp.gt.f32.partialorder %v283, 0.8666667
        %s1248 = scalar_lea.vmem %s219, 104 [#allocation7]
        %v1249 = vld [vmem:[%s1248] sm:$0xff]
        %v1250 = vsel %vm1240, 1, 0
        %v1251 = vsel %vm1241, 1, 0
        %v1252 = vsel %vm1242, 1, 0
        %v1253 = vsel %vm1243, 1, 0
        %v1254 = vsel %vm1244, 1, 0
        %v1255 = vsel %vm1245, 1, 0
        %v1256 = vsel %vm1246, 1, 0
        %v1257 = vsel %vm1247, 1, 0
        %v1258 = vcvt.s32.f32 %v1250
        %v1259 = vcvt.s32.f32 %v1251
        %v1260 = vcvt.s32.f32 %v1252
        %v1261 = vcvt.s32.f32 %v1253
        %v1262 = vcvt.s32.f32 %v1254
        %v1263 = vcvt.s32.f32 %v1255
        %v1264 = vcvt.s32.f32 %v1256
        %v1265 = vcvt.s32.f32 %v1257
        %v1266 = vadd.f32 %v1258, %v1259
        %v1267 = vadd.f32 %v1266, %v1260
        %v1268 = vadd.f32 %v1267, %v1261
        %v1269 = vadd.f32 %v1268, %v1262
        %v1270 = vadd.f32 %v1269, %v1263
        %v1271 = vadd.f32 %v1270, %v1264
        %v1272 = vadd.f32 %v1271, %v1265
        %v1273 = vadd.f32 %v1249, %v1272
        %1274 = vst [vmem:[%s1248] sm:$0xff] %v1273
        %s1275 = scalar_lea.vmem %s219, 232 [#allocation7]
        %v1276 = vld [vmem:[%s1275] sm:$0xff]
        %v1277 = vsel %vm1240, %v284, 0.0
        %v1278 = vsel %vm1241, %v285, 0.0
        %v1279 = vsel %vm1242, %v286, 0.0
        %v1280 = vsel %vm1243, %v287, 0.0
        %v1281 = vsel %vm1244, %v288, 0.0
        %v1282 = vsel %vm1245, %v289, 0.0
        %v1283 = vsel %vm1246, %v290, 0.0
        %v1284 = vsel %vm1247, %v291, 0.0
        %v1285 = vadd.f32 %v1277, %v1278
        %v1286 = vadd.f32 %v1285, %v1279
        %v1287 = vadd.f32 %v1286, %v1280
        %v1288 = vadd.f32 %v1287, %v1281
        %v1289 = vadd.f32 %v1288, %v1282
        %v1290 = vadd.f32 %v1289, %v1283
        %v1291 = vadd.f32 %v1290, %v1284
        %v1292 = vadd.f32 %v1276, %v1291
        %1293 = vst [vmem:[%s1275] sm:$0xff] %v1292
        %s1294 = scalar_lea.vmem %s219, 360 [#allocation7]
        %v1295 = vld [vmem:[%s1294] sm:$0xff]
        %v1296 = vsel %vm1240, %v276, 0.0
        %v1297 = vsel %vm1241, %v277, 0.0
        %v1298 = vsel %vm1242, %v278, 0.0
        %v1299 = vsel %vm1243, %v279, 0.0
        %v1300 = vsel %vm1244, %v280, 0.0
        %v1301 = vsel %vm1245, %v281, 0.0
        %v1302 = vsel %vm1246, %v282, 0.0
        %v1303 = vsel %vm1247, %v283, 0.0
        %v1304 = vadd.f32 %v1296, %v1297
        %v1305 = vadd.f32 %v1304, %v1298
        %v1306 = vadd.f32 %v1305, %v1299
        %v1307 = vadd.f32 %v1306, %v1300
        %v1308 = vadd.f32 %v1307, %v1301
        %v1309 = vadd.f32 %v1308, %v1302
        %v1310 = vadd.f32 %v1309, %v1303
        %v1311 = vadd.f32 %v1295, %v1310
        %1312 = vst [vmem:[%s1294] sm:$0xff] %v1311
        %vm1313 = vcmp.gt.f32.partialorder %v276, 0.93333334
        %vm1314 = vcmp.gt.f32.partialorder %v277, 0.93333334
        %vm1315 = vcmp.gt.f32.partialorder %v278, 0.93333334
        %vm1316 = vcmp.gt.f32.partialorder %v279, 0.93333334
        %vm1317 = vcmp.gt.f32.partialorder %v280, 0.93333334
        %vm1318 = vcmp.gt.f32.partialorder %v281, 0.93333334
        %vm1319 = vcmp.gt.f32.partialorder %v282, 0.93333334
        %vm1320 = vcmp.gt.f32.partialorder %v283, 0.93333334
        %s1321 = scalar_lea.vmem %s219, 112 [#allocation7]
        %v1322 = vld [vmem:[%s1321] sm:$0xff]
        %v1323 = vsel %vm1313, 1, 0
        %v1324 = vsel %vm1314, 1, 0
        %v1325 = vsel %vm1315, 1, 0
        %v1326 = vsel %vm1316, 1, 0
        %v1327 = vsel %vm1317, 1, 0
        %v1328 = vsel %vm1318, 1, 0
        %v1329 = vsel %vm1319, 1, 0
        %v1330 = vsel %vm1320, 1, 0
        %v1331 = vcvt.s32.f32 %v1323
        %v1332 = vcvt.s32.f32 %v1324
        %v1333 = vcvt.s32.f32 %v1325
        %v1334 = vcvt.s32.f32 %v1326
        %v1335 = vcvt.s32.f32 %v1327
        %v1336 = vcvt.s32.f32 %v1328
        %v1337 = vcvt.s32.f32 %v1329
        %v1338 = vcvt.s32.f32 %v1330
        %v1339 = vadd.f32 %v1331, %v1332
        %v1340 = vadd.f32 %v1339, %v1333
        %v1341 = vadd.f32 %v1340, %v1334
        %v1342 = vadd.f32 %v1341, %v1335
        %v1343 = vadd.f32 %v1342, %v1336
        %v1344 = vadd.f32 %v1343, %v1337
        %v1345 = vadd.f32 %v1344, %v1338
        %v1346 = vadd.f32 %v1322, %v1345
        %1347 = vst [vmem:[%s1321] sm:$0xff] %v1346
        %s1348 = scalar_lea.vmem %s219, 240 [#allocation7]
        %v1349 = vld [vmem:[%s1348] sm:$0xff]
        %v1350 = vsel %vm1313, %v284, 0.0
        %v1351 = vsel %vm1314, %v285, 0.0
        %v1352 = vsel %vm1315, %v286, 0.0
        %v1353 = vsel %vm1316, %v287, 0.0
        %v1354 = vsel %vm1317, %v288, 0.0
        %v1355 = vsel %vm1318, %v289, 0.0
        %v1356 = vsel %vm1319, %v290, 0.0
        %v1357 = vsel %vm1320, %v291, 0.0
        %v1358 = vadd.f32 %v1350, %v1351
        %v1359 = vadd.f32 %v1358, %v1352
        %v1360 = vadd.f32 %v1359, %v1353
        %v1361 = vadd.f32 %v1360, %v1354
        %v1362 = vadd.f32 %v1361, %v1355
        %v1363 = vadd.f32 %v1362, %v1356
        %v1364 = vadd.f32 %v1363, %v1357
        %v1365 = vadd.f32 %v1349, %v1364
        %1366 = vst [vmem:[%s1348] sm:$0xff] %v1365
        %s1367 = scalar_lea.vmem %s219, 368 [#allocation7]
        %v1368 = vld [vmem:[%s1367] sm:$0xff]
        %v1369 = vsel %vm1313, %v276, 0.0
        %v1370 = vsel %vm1314, %v277, 0.0
        %v1371 = vsel %vm1315, %v278, 0.0
        %v1372 = vsel %vm1316, %v279, 0.0
        %v1373 = vsel %vm1317, %v280, 0.0
        %v1374 = vsel %vm1318, %v281, 0.0
        %v1375 = vsel %vm1319, %v282, 0.0
        %v1376 = vsel %vm1320, %v283, 0.0
        %v1377 = vadd.f32 %v1369, %v1370
        %v1378 = vadd.f32 %v1377, %v1371
        %v1379 = vadd.f32 %v1378, %v1372
        %v1380 = vadd.f32 %v1379, %v1373
        %v1381 = vadd.f32 %v1380, %v1374
        %v1382 = vadd.f32 %v1381, %v1375
        %v1383 = vadd.f32 %v1382, %v1376
        %v1384 = vadd.f32 %v1368, %v1383
        %1385 = vst [vmem:[%s1367] sm:$0xff] %v1384
        %vm1386 = vcmp.gt.f32.partialorder %v276, 1.0
        %vm1387 = vcmp.gt.f32.partialorder %v277, 1.0
        %vm1388 = vcmp.gt.f32.partialorder %v278, 1.0
        %vm1389 = vcmp.gt.f32.partialorder %v279, 1.0
        %vm1390 = vcmp.gt.f32.partialorder %v280, 1.0
        %vm1391 = vcmp.gt.f32.partialorder %v281, 1.0
        %vm1392 = vcmp.gt.f32.partialorder %v282, 1.0
        %vm1393 = vcmp.gt.f32.partialorder %v283, 1.0
        %s1394 = scalar_lea.vmem %s219, 120 [#allocation7]
        %v1395 = vld [vmem:[%s1394] sm:$0xff]
        %v1396 = vsel %vm1386, 1, 0
        %v1397 = vsel %vm1387, 1, 0
        %v1398 = vsel %vm1388, 1, 0
        %v1399 = vsel %vm1389, 1, 0
        %v1400 = vsel %vm1390, 1, 0
        %v1401 = vsel %vm1391, 1, 0
        %v1402 = vsel %vm1392, 1, 0
        %v1403 = vsel %vm1393, 1, 0
        %v1404 = vcvt.s32.f32 %v1396
        %v1405 = vcvt.s32.f32 %v1397
        %v1406 = vcvt.s32.f32 %v1398
        %v1407 = vcvt.s32.f32 %v1399
        %v1408 = vcvt.s32.f32 %v1400
        %v1409 = vcvt.s32.f32 %v1401
        %v1410 = vcvt.s32.f32 %v1402
        %v1411 = vcvt.s32.f32 %v1403
        %v1412 = vadd.f32 %v1404, %v1405
        %v1413 = vadd.f32 %v1412, %v1406
        %v1414 = vadd.f32 %v1413, %v1407
        %v1415 = vadd.f32 %v1414, %v1408
        %v1416 = vadd.f32 %v1415, %v1409
        %v1417 = vadd.f32 %v1416, %v1410
        %v1418 = vadd.f32 %v1417, %v1411
        %v1419 = vadd.f32 %v1395, %v1418
        %1420 = vst [vmem:[%s1394] sm:$0xff] %v1419
        %s1421 = scalar_lea.vmem %s219, 248 [#allocation7]
        %v1422 = vld [vmem:[%s1421] sm:$0xff]
        %v1423 = vsel %vm1386, %v284, 0.0
        %v1424 = vsel %vm1387, %v285, 0.0
        %v1425 = vsel %vm1388, %v286, 0.0
        %v1426 = vsel %vm1389, %v287, 0.0
        %v1427 = vsel %vm1390, %v288, 0.0
        %v1428 = vsel %vm1391, %v289, 0.0
        %v1429 = vsel %vm1392, %v290, 0.0
        %v1430 = vsel %vm1393, %v291, 0.0
        %v1431 = vadd.f32 %v1423, %v1424
        %v1432 = vadd.f32 %v1431, %v1425
        %v1433 = vadd.f32 %v1432, %v1426
        %v1434 = vadd.f32 %v1433, %v1427
        %v1435 = vadd.f32 %v1434, %v1428
        %v1436 = vadd.f32 %v1435, %v1429
        %v1437 = vadd.f32 %v1436, %v1430
        %v1438 = vadd.f32 %v1422, %v1437
        %1439 = vst [vmem:[%s1421] sm:$0xff] %v1438
        %s1440 = scalar_lea.vmem %s219, 376 [#allocation7]
        %v1441 = vld [vmem:[%s1440] sm:$0xff]
        %v1442 = vsel %vm1386, %v276, 0.0
        %v1443 = vsel %vm1387, %v277, 0.0
        %v1444 = vsel %vm1388, %v278, 0.0
        %v1445 = vsel %vm1389, %v279, 0.0
        %v1446 = vsel %vm1390, %v280, 0.0
        %v1447 = vsel %vm1391, %v281, 0.0
        %v1448 = vsel %vm1392, %v282, 0.0
        %v1449 = vsel %vm1393, %v283, 0.0
        %v1450 = vadd.f32 %v1442, %v1443
        %v1451 = vadd.f32 %v1450, %v1444
        %v1452 = vadd.f32 %v1451, %v1445
        %v1453 = vadd.f32 %v1452, %v1446
        %v1454 = vadd.f32 %v1453, %v1447
        %v1455 = vadd.f32 %v1454, %v1448
        %v1456 = vadd.f32 %v1455, %v1449
        %v1457 = vadd.f32 %v1441, %v1456
        %1458 = vst [vmem:[%s1440] sm:$0xff] %v1457
        %s1459 = sand.u32 %s98, 1
        %s1460 = scalar_lea.sflag [#allocation4], %s1459
        %s1461 = sand.u32 %s98, 1
        %s1462 = smul.addr %s1461, 384
        %s1463 = scalar_lea.vmem [#allocation7], %s1462
        // Predicated region
        $region41: #{tpu_custom_call.1} parent=27 // pred_check
          %p1464 = pneg %p108
        $region42: #{tpu_custom_call.1} parent=27 // pred_check_branch
          %1466 = sbr.rel (%p1464) target = $region44
        $region43: #{tpu_custom_call.1} parent=27 // pred_region
          %s1468 = ssub.s32 6144, 6144
          %1469 = vsyncadd %s1460, %s1468
          %s1470 = smul.addr %s26, 48
          %s1471 = smul.addr %s1470, 128
          %s1472 = scalar_lea.hbm %s2, %s1471
          %s1473 = sshll.u32 %s1463, 4
          %s1474 = int_to_ptr.vmem [resolvable:$true] %s1473
          %1479 = dma.vmem_to_hbm [thread:$0]  %s1474, 6144, %s1472, %s1460, 128, 128, 8
        $region44: #{tpu_custom_call.1} parent=27 // pred_fallthru
          _
      $region28: #{tpu_custom_call.1} parent=5 // pred_fallthru
        _
      %p1480 = scmp.le.s32.totalorder 2, %s17
      // Predicated region
      $region45: #{tpu_custom_call.1} parent=5 // pred_check
        %p1481 = pneg %p1480
      $region46: #{tpu_custom_call.1} parent=5 // pred_check_branch
        %1483 = sbr.rel (%p1481) target = $region48
      $region47: #{tpu_custom_call.1} parent=5 // pred_region
        %s1484 = ssub.s32 %s17, 2
        // Predicated region
        $region49: #{tpu_custom_call.1} parent=47 // pred_check
          %p1485 = pneg %p114
        $region50: #{tpu_custom_call.1} parent=47 // pred_check_branch
          %1487 = sbr.rel (%p1485) target = $region52
        $region51: #{tpu_custom_call.1} parent=47 // pred_region
          %s1488 = sand.u32 %s99, 1
          %s1489 = scalar_lea.sflag [#allocation4], %s1488
          %s1490 = sand.u32 %s99, 1
          %s1491 = smul.addr %s1490, 384
          %s1492 = scalar_lea.vmem [#allocation7], %s1491
          %1493 = dma.done %s1489, 6144
        $region52: #{tpu_custom_call.1} parent=47 // pred_fallthru
          _
      $region48: #{tpu_custom_call.1} parent=5 // pred_fallthru
        _
    $region6: #{tpu_custom_call.1} parent=1 // loop_footer
      %s21 = sadd.s32 1, %s17
    $region7: #{tpu_custom_call.1} parent=1 // loop_footer_branch
      %16 = sbr.rel target = $region3
    $region8: #{tpu_custom_call.1} parent=1 // loop_exit
      _
    %1494 = vsyncpa [#allocation3], 1
    %s1495 = scalar_lea.sflag [#allocation3], 1
    %1496 = vsyncpa %s1495, 1
    %1497 = vsyncpa [#allocation6], 1
    %s1498 = scalar_lea.sflag [#allocation6], 1
    %1499 = vsyncpa %s1498, 1
    %1500 = vsyncpa [#allocation4], 1
    %s1501 = scalar_lea.sflag [#allocation4], 1
    %1502 = vsyncpa %s1501, 1

</llo_original>
